<compile_context>
chip_gen: v7x
topology: tpu7x:2x2x1
jax: 0.10.0
libtpu: 0.0.40
codegen_flags: <defaults>
</compile_context>

<pallas_src>
import functools

import jax
import jax.numpy as jnp
from jax.experimental import pallas as pl
from jax.experimental.pallas import tpu as pltpu


def _round_up(a, b):
    return (a + b - 1) // b * b


def _upsample_kernel(x_ref, e_ref, b_ref, o_ref, *, chunk, u, row_blk, n_blk):
    """One grid step: expand a (tile_m, tile_t) slab into (tile_m, tile_t*u),
    writing the interleaved layout y[m, t*u + k] = x[m, t] * w[k] + b.

    x_ref : (tile_m, tile_t)        VMEM  input slab
    e_ref : (chunk, chunk*u)        VMEM  expansion matrix, E[t, t*u+k] = w[k]
    b_ref : (1, 1)                  SMEM  scalar bias
    o_ref : (tile_m, tile_t*u)      VMEM  interleaved output slab
    """
    b = b_ref[0, 0]
    tm, tt = x_ref.shape
    ncol = chunk * u  # output columns produced per `chunk` input columns

    # Static (unrolled) sub-tiling keeps every dot's operands/results small
    # enough to stay in vregs (no spills) while the DMA tiles stay large.
    # NOTE: for very large upsampling factors the innermost loop should be
    # converted to a lax.fori_loop to bound unrolled code size.
    for r in range(0, tm, row_blk):
        rows = min(row_blk, tm - r)
        for c in range(0, tt, chunk):
            xc = x_ref[r:r + rows, c:c + chunk]            # (rows, chunk)
            for n in range(0, ncol, n_blk):
                ncols = min(n_blk, ncol - n)
                en = e_ref[:, n:n + ncols]                 # (chunk, ncols)
                # Exactly one non-zero per column of `en`, so this equals the
                # elementwise x*w; HIGHEST precision keeps it f32-exact.
                yc = jnp.dot(xc, en,
                             preferred_element_type=jnp.float32,
                             precision=jax.lax.Precision.HIGHEST)
                col0 = c * u + n
                o_ref[r:r + rows, col0:col0 + ncols] = (yc + b).astype(o_ref.dtype)


def upsampling_forward(x, weight, bias, upsampling_factor, *,
                       tile_m=256, tile_t=512):
    """Pallas equivalent of UpSampling.forward.

    Args:
      x:      (B, C, T) float tensor
      weight: (u,) float32  -- ConvTranspose2d weight[0, 0, 0, :]
      bias:   ()  float32   -- ConvTranspose2d bias[0]
      upsampling_factor: u
    Returns:
      (B, C, T * u), same dtype as x.
    """
    B, C, T = x.shape
    u = int(upsampling_factor)
    M = B * C

    CHUNK = 128    # K of the expansion matmul (lane aligned)
    N_BLK = 128    # N sub-tile of the expansion matmul
    ROW_BLK = 128  # M sub-tile of the expansion matmul

    x2d = x.reshape(M, T).astype(jnp.float32)

    # --- tile selection (lane-dense last dims, sublane-aligned rows) -------
    tile_t = max(CHUNK, _round_up(tile_t, CHUNK))
    tile_m = max(8, _round_up(tile_m, 8))
    tile_t_eff = min(tile_t, _round_up(T, CHUNK))
    tile_m_eff = min(tile_m, _round_up(M, 8))

    # Keep double-buffered blocks well under the scoped VMEM budget
    # (conservative so the same tiles also fit v7x's 64 MiB VMEM).
    def _block_bytes(tm, tt):
        return 4 * (2 * tm * tt            # input, double buffered
                    + 2 * tm * tt * u      # output, double buffered
                    + 2 * CHUNK * CHUNK * u)  # expansion matrix
    budget = 24 * 1024 * 1024
    while tile_t_eff > CHUNK and _block_bytes(tile_m_eff, tile_t_eff) > budget:
        tile_t_eff = max(CHUNK, _round_up(tile_t_eff // 2, CHUNK))
    while tile_m_eff > 8 and _block_bytes(tile_m_eff, tile_t_eff) > budget:
        tile_m_eff = max(8, _round_up(tile_m_eff // 2, 8))

    T_pad = _round_up(T, tile_t_eff)
    M_pad = _round_up(M, tile_m_eff)
    padded = (M_pad, T_pad) != (M, T)
    if padded:
        x2d = jnp.pad(x2d, ((0, M_pad - M), (0, T_pad - T)))

    # Expansion matrix E: (CHUNK, CHUNK*u) with E[t, t*u + k] = w[k]
    w = jnp.asarray(weight, jnp.float32).reshape(u)
    E = (jnp.eye(CHUNK, dtype=jnp.float32)[:, :, None]
         * w[None, None, :]).reshape(CHUNK, CHUNK * u)
    b2d = jnp.asarray(bias, jnp.float32).reshape(1, 1)

    grid = (M_pad // tile_m_eff, T_pad // tile_t_eff)
    kernel = functools.partial(_upsample_kernel, chunk=CHUNK, u=u,
                               row_blk=ROW_BLK, n_blk=N_BLK)

    out = pl.pallas_call(
        kernel,
        out_shape=jax.ShapeDtypeStruct((M_pad, T_pad * u), jnp.float32),
        grid_spec=pltpu.PrefetchScalarGridSpec(
            num_scalar_prefetch=0,
            grid=grid,
            in_specs=[
                # input slab, tiled over (M, T)
                pl.BlockSpec((tile_m_eff, tile_t_eff), lambda i, j: (i, j)),
                # expansion matrix: constant index map -> fetched once
                pl.BlockSpec((CHUNK, CHUNK * u), lambda i, j: (0, 0)),
                # scalar bias in SMEM, constant index map -> fetched once
                pl.BlockSpec((1, 1), lambda i, j: (0, 0),
                             memory_space=pltpu.SMEM),
            ],
            # interleaved, lane-dense output slab (last dim multiple of 128)
            out_specs=pl.BlockSpec((tile_m_eff, tile_t_eff * u),
                                   lambda i, j: (i, j)),
        ),
        compiler_params=pltpu.CompilerParams(
            dimension_semantics=("parallel", "parallel"),
            vmem_limit_bytes=32 * 1024 * 1024,
        ),
    )(x2d, E, b2d)

    if padded:
        # Only pays a slice-copy when B*C or T are not tile-aligned.
        out = out[:M, :T * u]
    # (M, T*u) -> (B, C, T*u) is a free reshape (no transpose, no HBM copy).
    return out.reshape(B, C, T * u).astype(x.dtype)


if __name__ == "__main__":
    def _torch_like_params(key, u):
        # ConvTranspose2d(1, 1, kernel_size=(1, u)) default init:
        # U(-1/sqrt(fan), 1/sqrt(fan)) with fan = u.
        bound = 1.0 / jnp.sqrt(jnp.float32(u))
        kw, kb = jax.random.split(key)
        weight = jax.random.uniform(kw, (u,), jnp.float32, -bound, bound)
        bias = jax.random.uniform(kb, (), jnp.float32, -bound, bound)
        return weight, bias

    key = jax.random.PRNGKey(0)
    # Case 1: tiny T (exercises the padded, single-block path).
    # Case 2: 128-aligned T (exercises the chunked/tiled path).
    cases = [(2, 4, 16, 4), (2, 4, 256, 8)]

    for (B, C, T, u) in cases:
        key, kx, kp = jax.random.split(key, 3)
        x = jax.random.normal(kx, (B, C, T), dtype=jnp.float32)
        weight, bias = _torch_like_params(kp, u)

        y = jax.block_until_ready(upsampling_forward(x, weight, bias, u))

        # Pure-JAX reference (exact ConvTranspose2d semantics for this config).
        y_ref = (x[..., :, None] * weight[None, None, None, :]
                 + bias).reshape(B, C, T * u)

        assert y.shape == (B, C, T * u)
        assert jnp.allclose(y, y_ref, atol=1e-5, rtol=1e-5), (
            f"mismatch for case {(B, C, T, u)}: "
            f"max err {jnp.max(jnp.abs(y - y_ref))}")

    print("KERNEL_OK")
</pallas_src>

<mosaic_0001>
module attributes {stable_mosaic.version = 11 : i64} {
  func.func @_upsample_kernel(%arg0: i32, %arg1: i32, %arg2: memref<8x128xf32, #tpu.memory_space<vmem>>, %arg3: memref<128x512xf32, #tpu.memory_space<vmem>>, %arg4: memref<1x1xf32, #tpu.memory_space<smem>>, %arg5: memref<8x512xf32, #tpu.memory_space<vmem>>) attributes {dimension_semantics = [#tpu.dimension_semantics<parallel>, #tpu.dimension_semantics<parallel>], iteration_bounds = array<i64: 1, 1>, scalar_prefetch = 0 : i64, scratch_operands = 0 : i64, tpu.core_type = #tpu.core_type<tc>, window_params = [{transform_indices = @transform_0, window_bounds = array<i64: 8, 128>}, {pipeline_mode = #tpu.pipeline_mode<synchronous>, transform_indices = @transform_1, window_bounds = array<i64: 128, 512>}, {transform_indices = @transform_2, window_bounds = array<i64: 1, 1>}, {transform_indices = @transform_3, window_bounds = array<i64: 8, 512>}]} {
    %c0 = arith.constant 0 : index
    %c0_0 = arith.constant 0 : index
    %0 = memref.load %arg4[%c0, %c0_0] : memref<1x1xf32, #tpu.memory_space<smem>>
    %c0_1 = arith.constant 0 : index
    %c0_2 = arith.constant 0 : index
    %1 = vector.load %arg2[%c0_1, %c0_2] : memref<8x128xf32, #tpu.memory_space<vmem>>, vector<8x128xf32>
    %c0_3 = arith.constant 0 : index
    %c0_4 = arith.constant 0 : index
    %2 = vector.load %arg3[%c0_3, %c0_4] : memref<128x512xf32, #tpu.memory_space<vmem>>, vector<128x128xf32>
    %cst = arith.constant dense<0.000000e+00> : vector<8x128xf32>
    %3 = tpu.matmul %1, %2, %cst {dimension_numbers = #tpu.dot_dimension_numbers<[1], [0], [0], [1], [0, 0, 1, 1], [], []>, precision = #tpu.contract_precision<fp32>} : vector<8x128xf32>, vector<128x128xf32>, vector<8x128xf32> -> vector<8x128xf32>
    %4 = vector.broadcast %0 : f32 to vector<8x128xf32>
    %5 = arith.addf %3, %4 : vector<8x128xf32>
    %c0_5 = arith.constant 0 : index
    %c0_6 = arith.constant 0 : index
    %6 = vector.load %arg5[%c0_5, %c0_6] : memref<8x512xf32, #tpu.memory_space<vmem>>, vector<8x128xf32>
    tpu.vector_store %arg5[%c0_5, %c0_6], %5 {strides = array<i32>} : memref<8x512xf32, #tpu.memory_space<vmem>>, vector<8x128xf32>,
    %c0_7 = arith.constant 0 : index
    %c128 = arith.constant 128 : index
    %7 = vector.load %arg3[%c0_7, %c128] : memref<128x512xf32, #tpu.memory_space<vmem>>, vector<128x128xf32>
    %cst_8 = arith.constant dense<0.000000e+00> : vector<8x128xf32>
    %8 = tpu.matmul %1, %7, %cst_8 {dimension_numbers = #tpu.dot_dimension_numbers<[1], [0], [0], [1], [0, 0, 1, 1], [], []>, precision = #tpu.contract_precision<fp32>} : vector<8x128xf32>, vector<128x128xf32>, vector<8x128xf32> -> vector<8x128xf32>
    %9 = vector.broadcast %0 : f32 to vector<8x128xf32>
    %10 = arith.addf %8, %9 : vector<8x128xf32>
    %c0_9 = arith.constant 0 : index
    %c128_10 = arith.constant 128 : index
    %11 = vector.load %arg5[%c0_9, %c128_10] : memref<8x512xf32, #tpu.memory_space<vmem>>, vector<8x128xf32>
    tpu.vector_store %arg5[%c0_9, %c128_10], %10 {strides = array<i32>} : memref<8x512xf32, #tpu.memory_space<vmem>>, vector<8x128xf32>,
    %c0_11 = arith.constant 0 : index
    %c256 = arith.constant 256 : index
    %12 = vector.load %arg3[%c0_11, %c256] : memref<128x512xf32, #tpu.memory_space<vmem>>, vector<128x128xf32>
    %cst_12 = arith.constant dense<0.000000e+00> : vector<8x128xf32>
    %13 = tpu.matmul %1, %12, %cst_12 {dimension_numbers = #tpu.dot_dimension_numbers<[1], [0], [0], [1], [0, 0, 1, 1], [], []>, precision = #tpu.contract_precision<fp32>} : vector<8x128xf32>, vector<128x128xf32>, vector<8x128xf32> -> vector<8x128xf32>
    %14 = vector.broadcast %0 : f32 to vector<8x128xf32>
    %15 = arith.addf %13, %14 : vector<8x128xf32>
    %c0_13 = arith.constant 0 : index
    %c256_14 = arith.constant 256 : index
    %16 = vector.load %arg5[%c0_13, %c256_14] : memref<8x512xf32, #tpu.memory_space<vmem>>, vector<8x128xf32>
    tpu.vector_store %arg5[%c0_13, %c256_14], %15 {strides = array<i32>} : memref<8x512xf32, #tpu.memory_space<vmem>>, vector<8x128xf32>,
    %c0_15 = arith.constant 0 : index
    %c384 = arith.constant 384 : index
    %17 = vector.load %arg3[%c0_15, %c384] : memref<128x512xf32, #tpu.memory_space<vmem>>, vector<128x128xf32>
    %cst_16 = arith.constant dense<0.000000e+00> : vector<8x128xf32>
    %18 = tpu.matmul %1, %17, %cst_16 {dimension_numbers = #tpu.dot_dimension_numbers<[1], [0], [0], [1], [0, 0, 1, 1], [], []>, precision = #tpu.contract_precision<fp32>} : vector<8x128xf32>, vector<128x128xf32>, vector<8x128xf32> -> vector<8x128xf32>
    %19 = vector.broadcast %0 : f32 to vector<8x128xf32>
    %20 = arith.addf %18, %19 : vector<8x128xf32>
    %c0_17 = arith.constant 0 : index
    %c384_18 = arith.constant 384 : index
    %21 = vector.load %arg5[%c0_17, %c384_18] : memref<8x512xf32, #tpu.memory_space<vmem>>, vector<8x128xf32>
    tpu.vector_store %arg5[%c0_17, %c384_18], %20 {strides = array<i32>} : memref<8x512xf32, #tpu.memory_space<vmem>>, vector<8x128xf32>,
    return
  }
  func.func @transform_0(%arg0: i32, %arg1: i32) -> (i32, i32) {
    %c0_i32 = arith.constant 0 : i32
    return %arg0, %arg1 : i32, i32
  }
  func.func @transform_1(%arg0: i32, %arg1: i32) -> (i32, i32) {
    %c0_i32 = arith.constant 0 : i32
    %c0_i32_0 = arith.constant 0 : i32
    %c0_i32_1 = arith.constant 0 : i32
    return %c0_i32, %c0_i32_0 : i32, i32
  }
  func.func @transform_2(%arg0: i32, %arg1: i32) -> (i32, i32) {
    %c0_i32 = arith.constant 0 : i32
    %c0_i32_0 = arith.constant 0 : i32
    %c0_i32_1 = arith.constant 0 : i32
    return %c0_i32, %c0_i32_0 : i32, i32
  }
  func.func @transform_3(%arg0: i32, %arg1: i32) -> (i32, i32) {
    %c0_i32 = arith.constant 0 : i32
    return %arg0, %arg1 : i32, i32
  }
}

</mosaic_0001>

<llo_original>
// kernel: tpu_custom_call.1
$region0: #{tpu_custom_call.1}
  #allocation0 [shape = 'u32[]', space=smem, size = 0x4, offset = 0x4, fixed_abs, tag = 'smem constant byte address 0x4 - core index']
  #allocation1 [shape = 'u32[144,128]{1,0:T(1,128)}', space=vmem, size = 0x12000, scoped, tag = 'internal scratch']
  #allocation2 [shape = 'f32[1,1]{1,0:T(1,128)S(6)}', space=smem, size = 0x200, scoped, tag = 'scoped memory for tpu_custom_call.1']
  %s0 = inlined_call_operand.hbm [shape: f32[8,128], index: 0, kind: input, shape index: {}]
  %s1 = inlined_call_operand.hbm [shape: f32[128,512], index: 1, kind: input, shape index: {}]
  %s2 = inlined_call_operand.<no memory space> [shape: f32[1,1], index: 2, kind: input, shape index: {}]
  %s3 = inlined_call_operand.hbm [shape: f32[8,512], index: 3, kind: output, shape index: {}]
  %s4 = sld [smem:[#allocation0]]
  $region30: #{tpu_custom_call.1} parent=0
    _
  %s6 = ssub.s32 1, %s4
  %s7 = scalar_select 0, %s6, %s4
  %8 = sst [smem:[#allocation2]] %s2
  $region1: #{tpu_custom_call.1} parent=0
    #allocation3 [shape = 'u8[4096]{0}', space=vmem, size = 0x1000, scoped, tag = 'input window, operand 0, single buffered']
    #allocation4 [shape = 's32[1]{0}', space=sflag, size = 0x4, scoped, tag = 'scoped memory for tpu_custom_call.1']
    #allocation5 [shape = 's32[1]{0}', space=sflag, size = 0x4, scoped, tag = 'scoped memory for tpu_custom_call.1']
    #allocation6 [shape = 'u8[262144]{0}', space=vmem, size = 0x40000, scoped, tag = 'input window, operand 1, single buffered']
    #allocation7 [shape = 's32[1]{0}', space=sflag, size = 0x4, scoped, tag = 'scoped memory for tpu_custom_call.1']
    #allocation8 [shape = 'u8[16384]{0}', space=vmem, size = 0x4000, scoped, tag = 'output window, operand 0, single buffered']
    %9 = vsyncpa [#allocation4], 0
    %10 = vsyncpa [#allocation7], 0
    %11 = vsyncpa [#allocation5], 0
    // Predicated region
    $region2: #{tpu_custom_call.1} parent=1 // pred_check
      _
    $region3: #{tpu_custom_call.1} parent=1 // pred_check_branch
      %13 = sbr.rel (0) target = $region5
    $region4: #{tpu_custom_call.1} parent=1 // pred_region
      %s15 = ssub.s32 128, 128
      %16 = vsyncadd [#allocation4], %s15
      %s18 = sshll.u32 [#allocation3], 4
      %s19 = int_to_ptr.vmem [resolvable:$true] %s18
      %21 = dma.hbm_to_vmem [thread:$0]  %s0, 128, %s19, [#allocation4]
    $region5: #{tpu_custom_call.1} parent=1 // pred_fallthru
      _
    // Predicated region
    $region6: #{tpu_custom_call.1} parent=1 // pred_check
      _
    $region7: #{tpu_custom_call.1} parent=1 // pred_check_branch
      %23 = sbr.rel (0) target = $region9
    $region8: #{tpu_custom_call.1} parent=1 // pred_region
      %s25 = ssub.s32 8192, 8192
      %26 = vsyncadd [#allocation7], %s25
      %s27 = sshll.u32 [#allocation6], 4
      %s28 = int_to_ptr.vmem [resolvable:$true] %s27
      %33 = dma.hbm_to_vmem [thread:$0]  %s1, 8192, %s28, [#allocation7], 512, 512, 32
    $region9: #{tpu_custom_call.1} parent=1 // pred_fallthru
      _
    // Predicated region
    $region10: #{tpu_custom_call.1} parent=1 // pred_check
      _
    $region11: #{tpu_custom_call.1} parent=1 // pred_check_branch
      %35 = sbr.rel (0) target = $region13
    $region12: #{tpu_custom_call.1} parent=1 // pred_region
      _
    $region13: #{tpu_custom_call.1} parent=1 // pred_fallthru
      _
    // Predicated region
    $region14: #{tpu_custom_call.1} parent=1 // pred_check
      _
    $region15: #{tpu_custom_call.1} parent=1 // pred_check_branch
      %37 = sbr.rel (0) target = $region17
    $region16: #{tpu_custom_call.1} parent=1 // pred_region
      %38 = dma.done [#allocation4], 128
    $region17: #{tpu_custom_call.1} parent=1 // pred_fallthru
      _
    // Predicated region
    $region18: #{tpu_custom_call.1} parent=1 // pred_check
      _
    $region19: #{tpu_custom_call.1} parent=1 // pred_check_branch
      %40 = sbr.rel (0) target = $region21
    $region20: #{tpu_custom_call.1} parent=1 // pred_region
      %41 = dma.done [#allocation7], 8192
    $region21: #{tpu_custom_call.1} parent=1 // pred_fallthru
      _
    %s42 = sld [smem:[#allocation2]]
    %v43 = vld [vmem:[#allocation3] sm:$0xff]
    %v44 = vld [vmem:[#allocation6] sm:$0xff]
    %v45 = vld [vmem:[#allocation6 + $0x20] sm:$0xff]
    %v46 = vld [vmem:[#allocation6 + $0x40] sm:$0xff]
    %v47 = vld [vmem:[#allocation6 + $0x60] sm:$0xff]
    %v48 = vld [vmem:[#allocation6 + $0x80] sm:$0xff]
    %v49 = vld [vmem:[#allocation6 + $0xa0] sm:$0xff]
    %v50 = vld [vmem:[#allocation6 + $0xc0] sm:$0xff]
    %v51 = vld [vmem:[#allocation6 + $0xe0] sm:$0xff]
    %v52 = vld [vmem:[#allocation6 + $0x100] sm:$0xff]
    %v53 = vld [vmem:[#allocation6 + $0x120] sm:$0xff]
    %v54 = vld [vmem:[#allocation6 + $0x140] sm:$0xff]
    %v55 = vld [vmem:[#allocation6 + $0x160] sm:$0xff]
    %v56 = vld [vmem:[#allocation6 + $0x180] sm:$0xff]
    %v57 = vld [vmem:[#allocation6 + $0x1a0] sm:$0xff]
    %v58 = vld [vmem:[#allocation6 + $0x1c0] sm:$0xff]
    %v59 = vld [vmem:[#allocation6 + $0x1e0] sm:$0xff]
    %v60 = vstv %s42
    %61 = vmatprep.subr.mxu0 0.0
    %v62 = vand.u32 %v44, 4294901760
    %63 = vmatpush1.msra.mxu0 %v62
    %64 = vmatprep.subr.mxu0 0.0
    %v65 = vand.u32 %v45, 4294901760
    %66 = vmatpush1.msra.mxu0 %v65
    %67 = vmatprep.subr.mxu0 0.0
    %v68 = vand.u32 %v46, 4294901760
    %69 = vmatpush1.msra.mxu0 %v68
    %70 = vmatprep.subr.mxu0 0.0
    %v71 = vand.u32 %v47, 4294901760
    %72 = vmatpush1.msra.mxu0 %v71
    %73 = vmatprep.subr.mxu0 0.0
    %v74 = vand.u32 %v48, 4294901760
    %75 = vmatpush1.msra.mxu0 %v74
    %76 = vmatprep.subr.mxu0 0.0
    %v77 = vand.u32 %v49, 4294901760
    %78 = vmatpush1.msra.mxu0 %v77
    %79 = vmatprep.subr.mxu0 0.0
    %v80 = vand.u32 %v50, 4294901760
    %81 = vmatpush1.msra.mxu0 %v80
    %82 = vmatprep.subr.mxu0 0.0
    %v83 = vand.u32 %v51, 4294901760
    %84 = vmatpush1.msra.mxu0 %v83
    %85 = vmatprep.subr.mxu0 0.0
    %v86 = vand.u32 %v52, 4294901760
    %87 = vmatpush1.msra.mxu0 %v86
    %88 = vmatprep.subr.mxu0 0.0
    %v89 = vand.u32 %v53, 4294901760
    %90 = vmatpush1.msra.mxu0 %v89
    %91 = vmatprep.subr.mxu0 0.0
    %v92 = vand.u32 %v54, 4294901760
    %93 = vmatpush1.msra.mxu0 %v92
    %94 = vmatprep.subr.mxu0 0.0
    %v95 = vand.u32 %v55, 4294901760
    %96 = vmatpush1.msra.mxu0 %v95
    %97 = vmatprep.subr.mxu0 0.0
    %v98 = vand.u32 %v56, 4294901760
    %99 = vmatpush1.msra.mxu0 %v98
    %100 = vmatprep.subr.mxu0 0.0
    %v101 = vand.u32 %v57, 4294901760
    %102 = vmatpush1.msra.mxu0 %v101
    %103 = vmatprep.subr.mxu0 0.0
    %v104 = vand.u32 %v58, 4294901760
    %105 = vmatpush1.msra.mxu0 %v104
    %106 = vmatprep.subr.mxu0 0.0
    %v107 = vand.u32 %v59, 4294901760
    %108 = vmatpush1.msra.mxu0 %v107
    %109 = vmatprep.subr.mxu0 0.0
    %110 = vmatpush1.msra.mxu0 0.0
    %111 = vmatprep.subr.mxu0 0.0
    %112 = vmatpush1.msra.mxu0 0.0
    %113 = vmatprep.subr.mxu0 0.0
    %114 = vmatpush1.msra.mxu0 0.0
    %115 = vmatprep.subr.mxu0 0.0
    %116 = vmatpush1.msra.mxu0 0.0
    %117 = vmatprep.subr.mxu0 0.0
    %118 = vmatpush1.msra.mxu0 0.0
    %119 = vmatprep.subr.mxu0 0.0
    %120 = vmatpush1.msra.mxu0 0.0
    %121 = vmatprep.subr.mxu0 0.0
    %122 = vmatpush1.msra.mxu0 0.0
    %123 = vmatprep.subr.mxu0 0.0
    %124 = vmatpush1.msra.mxu0 0.0
    %125 = vmatprep.subr.mxu0 0.0
    %126 = vmatpush1.msra.mxu0 0.0
    %127 = vmatprep.subr.mxu0 0.0
    %128 = vmatpush1.msra.mxu0 0.0
    %129 = vmatprep.subr.mxu0 0.0
    %130 = vmatpush1.msra.mxu0 0.0
    %131 = vmatprep.subr.mxu0 0.0
    %132 = vmatpush1.msra.mxu0 0.0
    %133 = vmatprep.subr.mxu0 0.0
    %134 = vmatpush1.msra.mxu0 0.0
    %135 = vmatprep.subr.mxu0 0.0
    %136 = vmatpush1.msra.mxu0 0.0
    %137 = vmatprep.subr.mxu0 0.0
    %138 = vmatpush1.msra.mxu0 0.0
    %139 = vmatprep.subr.mxu0 0.0
    %140 = vmatpush1.msra.mxu0 0.0
    %141 = vmatprep.mubr.f32.mxu0 0.0
    %v142 = vand.u32 %v43, 4294901760
    %v143 = vsub.f32 %v43, %v142
    %v144 = vand.u32 %v143, 4294901760
    %v145 = vsub.f32 %v143, %v144
    %v146 = vand.u32 %v145, 4294901760
    %147 = vmatmul.mubr.f32.gmra.mrb[0].mxu0 %v146
    %v148 = vpop.f32.mrb[0].mxu0
    %v149 = vadd.f32 %v60, %v148
    %v150 = vpop.f32.mrb[0].mxu0
    %151 = vdwg.mxu0
    %152 = vmatprep.subr.mxu0 0.0
    %v153 = vand.u32 %v44, 4294901760
    %v154 = vsub.f32 %v44, %v153
    %v155 = vand.u32 %v154, 4294901760
    %v156 = vsub.f32 %v154, %v155
    %v157 = vand.u32 %v156, 4294901760
    %158 = vmatpush1.msra.mxu0 %v157
    %159 = vmatprep.subr.mxu0 0.0
    %v160 = vand.u32 %v45, 4294901760
    %v161 = vsub.f32 %v45, %v160
    %v162 = vand.u32 %v161, 4294901760
    %v163 = vsub.f32 %v161, %v162
    %v164 = vand.u32 %v163, 4294901760
    %165 = vmatpush1.msra.mxu0 %v164
    %166 = vmatprep.subr.mxu0 0.0
    %v167 = vand.u32 %v46, 4294901760
    %v168 = vsub.f32 %v46, %v167
    %v169 = vand.u32 %v168, 4294901760
    %v170 = vsub.f32 %v168, %v169
    %v171 = vand.u32 %v170, 4294901760
    %172 = vmatpush1.msra.mxu0 %v171
    %173 = vmatprep.subr.mxu0 0.0
    %v174 = vand.u32 %v47, 4294901760
    %v175 = vsub.f32 %v47, %v174
    %v176 = vand.u32 %v175, 4294901760
    %v177 = vsub.f32 %v175, %v176
    %v178 = vand.u32 %v177, 4294901760
    %179 = vmatpush1.msra.mxu0 %v178
    %180 = vmatprep.subr.mxu0 0.0
    %v181 = vand.u32 %v48, 4294901760
    %v182 = vsub.f32 %v48, %v181
    %v183 = vand.u32 %v182, 4294901760
    %v184 = vsub.f32 %v182, %v183
    %v185 = vand.u32 %v184, 4294901760
    %186 = vmatpush1.msra.mxu0 %v185
    %187 = vmatprep.subr.mxu0 0.0
    %v188 = vand.u32 %v49, 4294901760
    %v189 = vsub.f32 %v49, %v188
    %v190 = vand.u32 %v189, 4294901760
    %v191 = vsub.f32 %v189, %v190
    %v192 = vand.u32 %v191, 4294901760
    %193 = vmatpush1.msra.mxu0 %v192
    %194 = vmatprep.subr.mxu0 0.0
    %v195 = vand.u32 %v50, 4294901760
    %v196 = vsub.f32 %v50, %v195
    %v197 = vand.u32 %v196, 4294901760
    %v198 = vsub.f32 %v196, %v197
    %v199 = vand.u32 %v198, 4294901760
    %200 = vmatpush1.msra.mxu0 %v199
    %201 = vmatprep.subr.mxu0 0.0
    %v202 = vand.u32 %v51, 4294901760
    %v203 = vsub.f32 %v51, %v202
    %v204 = vand.u32 %v203, 4294901760
    %v205 = vsub.f32 %v203, %v204
    %v206 = vand.u32 %v205, 4294901760
    %207 = vmatpush1.msra.mxu0 %v206
    %208 = vmatprep.subr.mxu0 0.0
    %v209 = vand.u32 %v52, 4294901760
    %v210 = vsub.f32 %v52, %v209
    %v211 = vand.u32 %v210, 4294901760
    %v212 = vsub.f32 %v210, %v211
    %v213 = vand.u32 %v212, 4294901760
    %214 = vmatpush1.msra.mxu0 %v213
    %215 = vmatprep.subr.mxu0 0.0
    %v216 = vand.u32 %v53, 4294901760
    %v217 = vsub.f32 %v53, %v216
    %v218 = vand.u32 %v217, 4294901760
    %v219 = vsub.f32 %v217, %v218
    %v220 = vand.u32 %v219, 4294901760
    %221 = vmatpush1.msra.mxu0 %v220
    %222 = vmatprep.subr.mxu0 0.0
    %v223 = vand.u32 %v54, 4294901760
    %v224 = vsub.f32 %v54, %v223
    %v225 = vand.u32 %v224, 4294901760
    %v226 = vsub.f32 %v224, %v225
    %v227 = vand.u32 %v226, 4294901760
    %228 = vmatpush1.msra.mxu0 %v227
    %229 = vmatprep.subr.mxu0 0.0
    %v230 = vand.u32 %v55, 4294901760
    %v231 = vsub.f32 %v55, %v230
    %v232 = vand.u32 %v231, 4294901760
    %v233 = vsub.f32 %v231, %v232
    %v234 = vand.u32 %v233, 4294901760
    %235 = vmatpush1.msra.mxu0 %v234
    %236 = vmatprep.subr.mxu0 0.0
    %v237 = vand.u32 %v56, 4294901760
    %v238 = vsub.f32 %v56, %v237
    %v239 = vand.u32 %v238, 4294901760
    %v240 = vsub.f32 %v238, %v239
    %v241 = vand.u32 %v240, 4294901760
    %242 = vmatpush1.msra.mxu0 %v241
    %243 = vmatprep.subr.mxu0 0.0
    %v244 = vand.u32 %v57, 4294901760
    %v245 = vsub.f32 %v57, %v244
    %v246 = vand.u32 %v245, 4294901760
    %v247 = vsub.f32 %v245, %v246
    %v248 = vand.u32 %v247, 4294901760
    %249 = vmatpush1.msra.mxu0 %v248
    %250 = vmatprep.subr.mxu0 0.0
    %v251 = vand.u32 %v58, 4294901760
    %v252 = vsub.f32 %v58, %v251
    %v253 = vand.u32 %v252, 4294901760
    %v254 = vsub.f32 %v252, %v253
    %v255 = vand.u32 %v254, 4294901760
    %256 = vmatpush1.msra.mxu0 %v255
    %257 = vmatprep.subr.mxu0 0.0
    %v258 = vand.u32 %v59, 4294901760
    %v259 = vsub.f32 %v59, %v258
    %v260 = vand.u32 %v259, 4294901760
    %v261 = vsub.f32 %v259, %v260
    %v262 = vand.u32 %v261, 4294901760
    %263 = vmatpush1.msra.mxu0 %v262
    %264 = vmatprep.subr.mxu0 0.0
    %265 = vmatpush1.msra.mxu0 0.0
    %266 = vmatprep.subr.mxu0 0.0
    %267 = vmatpush1.msra.mxu0 0.0
    %268 = vmatprep.subr.mxu0 0.0
    %269 = vmatpush1.msra.mxu0 0.0
    %270 = vmatprep.subr.mxu0 0.0
    %271 = vmatpush1.msra.mxu0 0.0
    %272 = vmatprep.subr.mxu0 0.0
    %273 = vmatpush1.msra.mxu0 0.0
    %274 = vmatprep.subr.mxu0 0.0
    %275 = vmatpush1.msra.mxu0 0.0
    %276 = vmatprep.subr.mxu0 0.0
    %277 = vmatpush1.msra.mxu0 0.0
    %278 = vmatprep.subr.mxu0 0.0
    %279 = vmatpush1.msra.mxu0 0.0
    %280 = vmatprep.subr.mxu0 0.0
    %281 = vmatpush1.msra.mxu0 0.0
    %282 = vmatprep.subr.mxu0 0.0
    %283 = vmatpush1.msra.mxu0 0.0
    %284 = vmatprep.subr.mxu0 0.0
    %285 = vmatpush1.msra.mxu0 0.0
    %286 = vmatprep.subr.mxu0 0.0
    %287 = vmatpush1.msra.mxu0 0.0
    %288 = vmatprep.subr.mxu0 0.0
    %289 = vmatpush1.msra.mxu0 0.0
    %290 = vmatprep.subr.mxu0 0.0
    %291 = vmatpush1.msra.mxu0 0.0
    %292 = vmatprep.subr.mxu0 0.0
    %293 = vmatpush1.msra.mxu0 0.0
    %294 = vmatprep.subr.mxu0 0.0
    %295 = vmatpush1.msra.mxu0 0.0
    %296 = vmatprep.mubr.f32.mxu0 0.0
    %v297 = vand.u32 %v43, 4294901760
    %298 = vmatmul.mubr.f32.gmra.mrb[0].mxu0 %v297
    %v299 = vpop.f32.mrb[0].mxu0
    %v300 = vadd.f32 %v149, %v299
    %v301 = vpop.f32.mrb[0].mxu0
    %302 = vdwg.mxu0
    %303 = vmatprep.subr.mxu0 0.0
    %v304 = vand.u32 %v44, 4294901760
    %v305 = vsub.f32 %v44, %v304
    %306 = vmatpush1.msra.mxu0 %v305
    %307 = vmatprep.subr.mxu0 0.0
    %v308 = vand.u32 %v45, 4294901760
    %v309 = vsub.f32 %v45, %v308
    %310 = vmatpush1.msra.mxu0 %v309
    %311 = vmatprep.subr.mxu0 0.0
    %v312 = vand.u32 %v46, 4294901760
    %v313 = vsub.f32 %v46, %v312
    %314 = vmatpush1.msra.mxu0 %v313
    %315 = vmatprep.subr.mxu0 0.0
    %v316 = vand.u32 %v47, 4294901760
    %v317 = vsub.f32 %v47, %v316
    %318 = vmatpush1.msra.mxu0 %v317
    %319 = vmatprep.subr.mxu0 0.0
    %v320 = vand.u32 %v48, 4294901760
    %v321 = vsub.f32 %v48, %v320
    %322 = vmatpush1.msra.mxu0 %v321
    %323 = vmatprep.subr.mxu0 0.0
    %v324 = vand.u32 %v49, 4294901760
    %v325 = vsub.f32 %v49, %v324
    %326 = vmatpush1.msra.mxu0 %v325
    %327 = vmatprep.subr.mxu0 0.0
    %v328 = vand.u32 %v50, 4294901760
    %v329 = vsub.f32 %v50, %v328
    %330 = vmatpush1.msra.mxu0 %v329
    %331 = vmatprep.subr.mxu0 0.0
    %v332 = vand.u32 %v51, 4294901760
    %v333 = vsub.f32 %v51, %v332
    %334 = vmatpush1.msra.mxu0 %v333
    %335 = vmatprep.subr.mxu0 0.0
    %v336 = vand.u32 %v52, 4294901760
    %v337 = vsub.f32 %v52, %v336
    %338 = vmatpush1.msra.mxu0 %v337
    %339 = vmatprep.subr.mxu0 0.0
    %v340 = vand.u32 %v53, 4294901760
    %v341 = vsub.f32 %v53, %v340
    %342 = vmatpush1.msra.mxu0 %v341
    %343 = vmatprep.subr.mxu0 0.0
    %v344 = vand.u32 %v54, 4294901760
    %v345 = vsub.f32 %v54, %v344
    %346 = vmatpush1.msra.mxu0 %v345
    %347 = vmatprep.subr.mxu0 0.0
    %v348 = vand.u32 %v55, 4294901760
    %v349 = vsub.f32 %v55, %v348
    %350 = vmatpush1.msra.mxu0 %v349
    %351 = vmatprep.subr.mxu0 0.0
    %v352 = vand.u32 %v56, 4294901760
    %v353 = vsub.f32 %v56, %v352
    %354 = vmatpush1.msra.mxu0 %v353
    %355 = vmatprep.subr.mxu0 0.0
    %v356 = vand.u32 %v57, 4294901760
    %v357 = vsub.f32 %v57, %v356
    %358 = vmatpush1.msra.mxu0 %v357
    %359 = vmatprep.subr.mxu0 0.0
    %v360 = vand.u32 %v58, 4294901760
    %v361 = vsub.f32 %v58, %v360
    %362 = vmatpush1.msra.mxu0 %v361
    %363 = vmatprep.subr.mxu0 0.0
    %v364 = vand.u32 %v59, 4294901760
    %v365 = vsub.f32 %v59, %v364
    %366 = vmatpush1.msra.mxu0 %v365
    %367 = vmatprep.subr.mxu0 0.0
    %368 = vmatpush1.msra.mxu0 0.0
    %369 = vmatprep.subr.mxu0 0.0
    %370 = vmatpush1.msra.mxu0 0.0
    %371 = vmatprep.subr.mxu0 0.0
    %372 = vmatpush1.msra.mxu0 0.0
    %373 = vmatprep.subr.mxu0 0.0
    %374 = vmatpush1.msra.mxu0 0.0
    %375 = vmatprep.subr.mxu0 0.0
    %376 = vmatpush1.msra.mxu0 0.0
    %377 = vmatprep.subr.mxu0 0.0
    %378 = vmatpush1.msra.mxu0 0.0
    %379 = vmatprep.subr.mxu0 0.0
    %380 = vmatpush1.msra.mxu0 0.0
    %381 = vmatprep.subr.mxu0 0.0
    %382 = vmatpush1.msra.mxu0 0.0
    %383 = vmatprep.subr.mxu0 0.0
    %384 = vmatpush1.msra.mxu0 0.0
    %385 = vmatprep.subr.mxu0 0.0
    %386 = vmatpush1.msra.mxu0 0.0
    %387 = vmatprep.subr.mxu0 0.0
    %388 = vmatpush1.msra.mxu0 0.0
    %389 = vmatprep.subr.mxu0 0.0
    %390 = vmatpush1.msra.mxu0 0.0
    %391 = vmatprep.subr.mxu0 0.0
    %392 = vmatpush1.msra.mxu0 0.0
    %393 = vmatprep.subr.mxu0 0.0
    %394 = vmatpush1.msra.mxu0 0.0
    %395 = vmatprep.subr.mxu0 0.0
    %396 = vmatpush1.msra.mxu0 0.0
    %397 = vmatprep.subr.mxu0 0.0
    %398 = vmatpush1.msra.mxu0 0.0
    %399 = vmatprep.mubr.f32.mxu0 0.0
    %v400 = vand.u32 %v43, 4294901760
    %v401 = vsub.f32 %v43, %v400
    %402 = vmatmul.mubr.f32.gmra.mrb[0].mxu0 %v401
    %v403 = vpop.f32.mrb[0].mxu0
    %v404 = vadd.f32 %v300, %v403
    %v405 = vpop.f32.mrb[0].mxu0
    %406 = vdwg.mxu0
    %407 = vmatprep.subr.mxu0 0.0
    %v408 = vand.u32 %v44, 4294901760
    %409 = vmatpush1.msra.mxu0 %v408
    %410 = vmatprep.subr.mxu0 0.0
    %v411 = vand.u32 %v45, 4294901760
    %412 = vmatpush1.msra.mxu0 %v411
    %413 = vmatprep.subr.mxu0 0.0
    %v414 = vand.u32 %v46, 4294901760
    %415 = vmatpush1.msra.mxu0 %v414
    %416 = vmatprep.subr.mxu0 0.0
    %v417 = vand.u32 %v47, 4294901760
    %418 = vmatpush1.msra.mxu0 %v417
    %419 = vmatprep.subr.mxu0 0.0
    %v420 = vand.u32 %v48, 4294901760
    %421 = vmatpush1.msra.mxu0 %v420
    %422 = vmatprep.subr.mxu0 0.0
    %v423 = vand.u32 %v49, 4294901760
    %424 = vmatpush1.msra.mxu0 %v423
    %425 = vmatprep.subr.mxu0 0.0
    %v426 = vand.u32 %v50, 4294901760
    %427 = vmatpush1.msra.mxu0 %v426
    %428 = vmatprep.subr.mxu0 0.0
    %v429 = vand.u32 %v51, 4294901760
    %430 = vmatpush1.msra.mxu0 %v429
    %431 = vmatprep.subr.mxu0 0.0
    %v432 = vand.u32 %v52, 4294901760
    %433 = vmatpush1.msra.mxu0 %v432
    %434 = vmatprep.subr.mxu0 0.0
    %v435 = vand.u32 %v53, 4294901760
    %436 = vmatpush1.msra.mxu0 %v435
    %437 = vmatprep.subr.mxu0 0.0
    %v438 = vand.u32 %v54, 4294901760
    %439 = vmatpush1.msra.mxu0 %v438
    %440 = vmatprep.subr.mxu0 0.0
    %v441 = vand.u32 %v55, 4294901760
    %442 = vmatpush1.msra.mxu0 %v441
    %443 = vmatprep.subr.mxu0 0.0
    %v444 = vand.u32 %v56, 4294901760
    %445 = vmatpush1.msra.mxu0 %v444
    %446 = vmatprep.subr.mxu0 0.0
    %v447 = vand.u32 %v57, 4294901760
    %448 = vmatpush1.msra.mxu0 %v447
    %449 = vmatprep.subr.mxu0 0.0
    %v450 = vand.u32 %v58, 4294901760
    %451 = vmatpush1.msra.mxu0 %v450
    %452 = vmatprep.subr.mxu0 0.0
    %v453 = vand.u32 %v59, 4294901760
    %454 = vmatpush1.msra.mxu0 %v453
    %455 = vmatprep.subr.mxu0 0.0
    %456 = vmatpush1.msra.mxu0 0.0
    %457 = vmatprep.subr.mxu0 0.0
    %458 = vmatpush1.msra.mxu0 0.0
    %459 = vmatprep.subr.mxu0 0.0
    %460 = vmatpush1.msra.mxu0 0.0
    %461 = vmatprep.subr.mxu0 0.0
    %462 = vmatpush1.msra.mxu0 0.0
    %463 = vmatprep.subr.mxu0 0.0
    %464 = vmatpush1.msra.mxu0 0.0
    %465 = vmatprep.subr.mxu0 0.0
    %466 = vmatpush1.msra.mxu0 0.0
    %467 = vmatprep.subr.mxu0 0.0
    %468 = vmatpush1.msra.mxu0 0.0
    %469 = vmatprep.subr.mxu0 0.0
    %470 = vmatpush1.msra.mxu0 0.0
    %471 = vmatprep.subr.mxu0 0.0
    %472 = vmatpush1.msra.mxu0 0.0
    %473 = vmatprep.subr.mxu0 0.0
    %474 = vmatpush1.msra.mxu0 0.0
    %475 = vmatprep.subr.mxu0 0.0
    %476 = vmatpush1.msra.mxu0 0.0
    %477 = vmatprep.subr.mxu0 0.0
    %478 = vmatpush1.msra.mxu0 0.0
    %479 = vmatprep.subr.mxu0 0.0
    %480 = vmatpush1.msra.mxu0 0.0
    %481 = vmatprep.subr.mxu0 0.0
    %482 = vmatpush1.msra.mxu0 0.0
    %483 = vmatprep.subr.mxu0 0.0
    %484 = vmatpush1.msra.mxu0 0.0
    %485 = vmatprep.subr.mxu0 0.0
    %486 = vmatpush1.msra.mxu0 0.0
    %487 = vmatprep.mubr.f32.mxu0 0.0
    %v488 = vand.u32 %v43, 4294901760
    %v489 = vsub.f32 %v43, %v488
    %v490 = vand.u32 %v489, 4294901760
    %491 = vmatmul.mubr.f32.gmra.mrb[0].mxu0 %v490
    %v492 = vpop.f32.mrb[0].mxu0
    %v493 = vadd.f32 %v404, %v492
    %v494 = vpop.f32.mrb[0].mxu0
    %495 = vdwg.mxu0
    %496 = vmatprep.subr.mxu0 0.0
    %v497 = vand.u32 %v44, 4294901760
    %v498 = vsub.f32 %v44, %v497
    %v499 = vand.u32 %v498, 4294901760
    %500 = vmatpush1.msra.mxu0 %v499
    %501 = vmatprep.subr.mxu0 0.0
    %v502 = vand.u32 %v45, 4294901760
    %v503 = vsub.f32 %v45, %v502
    %v504 = vand.u32 %v503, 4294901760
    %505 = vmatpush1.msra.mxu0 %v504
    %506 = vmatprep.subr.mxu0 0.0
    %v507 = vand.u32 %v46, 4294901760
    %v508 = vsub.f32 %v46, %v507
    %v509 = vand.u32 %v508, 4294901760
    %510 = vmatpush1.msra.mxu0 %v509
    %511 = vmatprep.subr.mxu0 0.0
    %v512 = vand.u32 %v47, 4294901760
    %v513 = vsub.f32 %v47, %v512
    %v514 = vand.u32 %v513, 4294901760
    %515 = vmatpush1.msra.mxu0 %v514
    %516 = vmatprep.subr.mxu0 0.0
    %v517 = vand.u32 %v48, 4294901760
    %v518 = vsub.f32 %v48, %v517
    %v519 = vand.u32 %v518, 4294901760
    %520 = vmatpush1.msra.mxu0 %v519
    %521 = vmatprep.subr.mxu0 0.0
    %v522 = vand.u32 %v49, 4294901760
    %v523 = vsub.f32 %v49, %v522
    %v524 = vand.u32 %v523, 4294901760
    %525 = vmatpush1.msra.mxu0 %v524
    %526 = vmatprep.subr.mxu0 0.0
    %v527 = vand.u32 %v50, 4294901760
    %v528 = vsub.f32 %v50, %v527
    %v529 = vand.u32 %v528, 4294901760
    %530 = vmatpush1.msra.mxu0 %v529
    %531 = vmatprep.subr.mxu0 0.0
    %v532 = vand.u32 %v51, 4294901760
    %v533 = vsub.f32 %v51, %v532
    %v534 = vand.u32 %v533, 4294901760
    %535 = vmatpush1.msra.mxu0 %v534
    %536 = vmatprep.subr.mxu0 0.0
    %v537 = vand.u32 %v52, 4294901760
    %v538 = vsub.f32 %v52, %v537
    %v539 = vand.u32 %v538, 4294901760
    %540 = vmatpush1.msra.mxu0 %v539
    %541 = vmatprep.subr.mxu0 0.0
    %v542 = vand.u32 %v53, 4294901760
    %v543 = vsub.f32 %v53, %v542
    %v544 = vand.u32 %v543, 4294901760
    %545 = vmatpush1.msra.mxu0 %v544
    %546 = vmatprep.subr.mxu0 0.0
    %v547 = vand.u32 %v54, 4294901760
    %v548 = vsub.f32 %v54, %v547
    %v549 = vand.u32 %v548, 4294901760
    %550 = vmatpush1.msra.mxu0 %v549
    %551 = vmatprep.subr.mxu0 0.0
    %v552 = vand.u32 %v55, 4294901760
    %v553 = vsub.f32 %v55, %v552
    %v554 = vand.u32 %v553, 4294901760
    %555 = vmatpush1.msra.mxu0 %v554
    %556 = vmatprep.subr.mxu0 0.0
    %v557 = vand.u32 %v56, 4294901760
    %v558 = vsub.f32 %v56, %v557
    %v559 = vand.u32 %v558, 4294901760
    %560 = vmatpush1.msra.mxu0 %v559
    %561 = vmatprep.subr.mxu0 0.0
    %v562 = vand.u32 %v57, 4294901760
    %v563 = vsub.f32 %v57, %v562
    %v564 = vand.u32 %v563, 4294901760
    %565 = vmatpush1.msra.mxu0 %v564
    %566 = vmatprep.subr.mxu0 0.0
    %v567 = vand.u32 %v58, 4294901760
    %v568 = vsub.f32 %v58, %v567
    %v569 = vand.u32 %v568, 4294901760
    %570 = vmatpush1.msra.mxu0 %v569
    %571 = vmatprep.subr.mxu0 0.0
    %v572 = vand.u32 %v59, 4294901760
    %v573 = vsub.f32 %v59, %v572
    %v574 = vand.u32 %v573, 4294901760
    %575 = vmatpush1.msra.mxu0 %v574
    %576 = vmatprep.subr.mxu0 0.0
    %577 = vmatpush1.msra.mxu0 0.0
    %578 = vmatprep.subr.mxu0 0.0
    %579 = vmatpush1.msra.mxu0 0.0
    %580 = vmatprep.subr.mxu0 0.0
    %581 = vmatpush1.msra.mxu0 0.0
    %582 = vmatprep.subr.mxu0 0.0
    %583 = vmatpush1.msra.mxu0 0.0
    %584 = vmatprep.subr.mxu0 0.0
    %585 = vmatpush1.msra.mxu0 0.0
    %586 = vmatprep.subr.mxu0 0.0
    %587 = vmatpush1.msra.mxu0 0.0
    %588 = vmatprep.subr.mxu0 0.0
    %589 = vmatpush1.msra.mxu0 0.0
    %590 = vmatprep.subr.mxu0 0.0
    %591 = vmatpush1.msra.mxu0 0.0
    %592 = vmatprep.subr.mxu0 0.0
    %593 = vmatpush1.msra.mxu0 0.0
    %594 = vmatprep.subr.mxu0 0.0
    %595 = vmatpush1.msra.mxu0 0.0
    %596 = vmatprep.subr.mxu0 0.0
    %597 = vmatpush1.msra.mxu0 0.0
    %598 = vmatprep.subr.mxu0 0.0
    %599 = vmatpush1.msra.mxu0 0.0
    %600 = vmatprep.subr.mxu0 0.0
    %601 = vmatpush1.msra.mxu0 0.0
    %602 = vmatprep.subr.mxu0 0.0
    %603 = vmatpush1.msra.mxu0 0.0
    %604 = vmatprep.subr.mxu0 0.0
    %605 = vmatpush1.msra.mxu0 0.0
    %606 = vmatprep.subr.mxu0 0.0
    %607 = vmatpush1.msra.mxu0 0.0
    %608 = vmatprep.mubr.f32.mxu0 0.0
    %v609 = vand.u32 %v43, 4294901760
    %610 = vmatmul.mubr.f32.gmra.mrb[0].mxu0 %v609
    %v611 = vpop.f32.mrb[0].mxu0
    %v612 = vadd.f32 %v493, %v611
    %v613 = vpop.f32.mrb[0].mxu0
    %614 = vdwg.mxu0
    %615 = vmatprep.subr.mxu0 0.0
    %v616 = vand.u32 %v44, 4294901760
    %617 = vmatpush1.msra.mxu0 %v616
    %618 = vmatprep.subr.mxu0 0.0
    %v619 = vand.u32 %v45, 4294901760
    %620 = vmatpush1.msra.mxu0 %v619
    %621 = vmatprep.subr.mxu0 0.0
    %v622 = vand.u32 %v46, 4294901760
    %623 = vmatpush1.msra.mxu0 %v622
    %624 = vmatprep.subr.mxu0 0.0
    %v625 = vand.u32 %v47, 4294901760
    %626 = vmatpush1.msra.mxu0 %v625
    %627 = vmatprep.subr.mxu0 0.0
    %v628 = vand.u32 %v48, 4294901760
    %629 = vmatpush1.msra.mxu0 %v628
    %630 = vmatprep.subr.mxu0 0.0
    %v631 = vand.u32 %v49, 4294901760
    %632 = vmatpush1.msra.mxu0 %v631
    %633 = vmatprep.subr.mxu0 0.0
    %v634 = vand.u32 %v50, 4294901760
    %635 = vmatpush1.msra.mxu0 %v634
    %636 = vmatprep.subr.mxu0 0.0
    %v637 = vand.u32 %v51, 4294901760
    %638 = vmatpush1.msra.mxu0 %v637
    %639 = vmatprep.subr.mxu0 0.0
    %v640 = vand.u32 %v52, 4294901760
    %641 = vmatpush1.msra.mxu0 %v640
    %642 = vmatprep.subr.mxu0 0.0
    %v643 = vand.u32 %v53, 4294901760
    %644 = vmatpush1.msra.mxu0 %v643
    %645 = vmatprep.subr.mxu0 0.0
    %v646 = vand.u32 %v54, 4294901760
    %647 = vmatpush1.msra.mxu0 %v646
    %648 = vmatprep.subr.mxu0 0.0
    %v649 = vand.u32 %v55, 4294901760
    %650 = vmatpush1.msra.mxu0 %v649
    %651 = vmatprep.subr.mxu0 0.0
    %v652 = vand.u32 %v56, 4294901760
    %653 = vmatpush1.msra.mxu0 %v652
    %654 = vmatprep.subr.mxu0 0.0
    %v655 = vand.u32 %v57, 4294901760
    %656 = vmatpush1.msra.mxu0 %v655
    %657 = vmatprep.subr.mxu0 0.0
    %v658 = vand.u32 %v58, 4294901760
    %659 = vmatpush1.msra.mxu0 %v658
    %660 = vmatprep.subr.mxu0 0.0
    %v661 = vand.u32 %v59, 4294901760
    %662 = vmatpush1.msra.mxu0 %v661
    %663 = vmatprep.subr.mxu0 0.0
    %664 = vmatpush1.msra.mxu0 0.0
    %665 = vmatprep.subr.mxu0 0.0
    %666 = vmatpush1.msra.mxu0 0.0
    %667 = vmatprep.subr.mxu0 0.0
    %668 = vmatpush1.msra.mxu0 0.0
    %669 = vmatprep.subr.mxu0 0.0
    %670 = vmatpush1.msra.mxu0 0.0
    %671 = vmatprep.subr.mxu0 0.0
    %672 = vmatpush1.msra.mxu0 0.0
    %673 = vmatprep.subr.mxu0 0.0
    %674 = vmatpush1.msra.mxu0 0.0
    %675 = vmatprep.subr.mxu0 0.0
    %676 = vmatpush1.msra.mxu0 0.0
    %677 = vmatprep.subr.mxu0 0.0
    %678 = vmatpush1.msra.mxu0 0.0
    %679 = vmatprep.subr.mxu0 0.0
    %680 = vmatpush1.msra.mxu0 0.0
    %681 = vmatprep.subr.mxu0 0.0
    %682 = vmatpush1.msra.mxu0 0.0
    %683 = vmatprep.subr.mxu0 0.0
    %684 = vmatpush1.msra.mxu0 0.0
    %685 = vmatprep.subr.mxu0 0.0
    %686 = vmatpush1.msra.mxu0 0.0
    %687 = vmatprep.subr.mxu0 0.0
    %688 = vmatpush1.msra.mxu0 0.0
    %689 = vmatprep.subr.mxu0 0.0
    %690 = vmatpush1.msra.mxu0 0.0
    %691 = vmatprep.subr.mxu0 0.0
    %692 = vmatpush1.msra.mxu0 0.0
    %693 = vmatprep.subr.mxu0 0.0
    %694 = vmatpush1.msra.mxu0 0.0
    %695 = vmatprep.mubr.f32.mxu0 0.0
    %v696 = vand.u32 %v43, 4294901760
    %697 = vmatmul.mubr.f32.gmra.mrb[0].mxu0 %v696
    %v698 = vpop.f32.mrb[0].mxu0
    %v699 = vadd.f32 %v612, %v698
    %v700 = vpop.f32.mrb[0].mxu0
    %701 = vdwg.mxu0
    %702 = vst [vmem:[#allocation8] sm:$0xff] %v699
    %v703 = vld [vmem:[#allocation6 + $0x8] sm:$0xff]
    %v704 = vld [vmem:[#allocation6 + $0x28] sm:$0xff]
    %v705 = vld [vmem:[#allocation6 + $0x48] sm:$0xff]
    %v706 = vld [vmem:[#allocation6 + $0x68] sm:$0xff]
    %v707 = vld [vmem:[#allocation6 + $0x88] sm:$0xff]
    %v708 = vld [vmem:[#allocation6 + $0xa8] sm:$0xff]
    %v709 = vld [vmem:[#allocation6 + $0xc8] sm:$0xff]
    %v710 = vld [vmem:[#allocation6 + $0xe8] sm:$0xff]
    %v711 = vld [vmem:[#allocation6 + $0x108] sm:$0xff]
    %v712 = vld [vmem:[#allocation6 + $0x128] sm:$0xff]
    %v713 = vld [vmem:[#allocation6 + $0x148] sm:$0xff]
    %v714 = vld [vmem:[#allocation6 + $0x168] sm:$0xff]
    %v715 = vld [vmem:[#allocation6 + $0x188] sm:$0xff]
    %v716 = vld [vmem:[#allocation6 + $0x1a8] sm:$0xff]
    %v717 = vld [vmem:[#allocation6 + $0x1c8] sm:$0xff]
    %v718 = vld [vmem:[#allocation6 + $0x1e8] sm:$0xff]
    %719 = vmatprep.subr.mxu0 0.0
    %v720 = vand.u32 %v703, 4294901760
    %721 = vmatpush1.msra.mxu0 %v720
    %722 = vmatprep.subr.mxu0 0.0
    %v723 = vand.u32 %v704, 4294901760
    %724 = vmatpush1.msra.mxu0 %v723
    %725 = vmatprep.subr.mxu0 0.0
    %v726 = vand.u32 %v705, 4294901760
    %727 = vmatpush1.msra.mxu0 %v726
    %728 = vmatprep.subr.mxu0 0.0
    %v729 = vand.u32 %v706, 4294901760
    %730 = vmatpush1.msra.mxu0 %v729
    %731 = vmatprep.subr.mxu0 0.0
    %v732 = vand.u32 %v707, 4294901760
    %733 = vmatpush1.msra.mxu0 %v732
    %734 = vmatprep.subr.mxu0 0.0
    %v735 = vand.u32 %v708, 4294901760
    %736 = vmatpush1.msra.mxu0 %v735
    %737 = vmatprep.subr.mxu0 0.0
    %v738 = vand.u32 %v709, 4294901760
    %739 = vmatpush1.msra.mxu0 %v738
    %740 = vmatprep.subr.mxu0 0.0
    %v741 = vand.u32 %v710, 4294901760
    %742 = vmatpush1.msra.mxu0 %v741
    %743 = vmatprep.subr.mxu0 0.0
    %v744 = vand.u32 %v711, 4294901760
    %745 = vmatpush1.msra.mxu0 %v744
    %746 = vmatprep.subr.mxu0 0.0
    %v747 = vand.u32 %v712, 4294901760
    %748 = vmatpush1.msra.mxu0 %v747
    %749 = vmatprep.subr.mxu0 0.0
    %v750 = vand.u32 %v713, 4294901760
    %751 = vmatpush1.msra.mxu0 %v750
    %752 = vmatprep.subr.mxu0 0.0
    %v753 = vand.u32 %v714, 4294901760
    %754 = vmatpush1.msra.mxu0 %v753
    %755 = vmatprep.subr.mxu0 0.0
    %v756 = vand.u32 %v715, 4294901760
    %757 = vmatpush1.msra.mxu0 %v756
    %758 = vmatprep.subr.mxu0 0.0
    %v759 = vand.u32 %v716, 4294901760
    %760 = vmatpush1.msra.mxu0 %v759
    %761 = vmatprep.subr.mxu0 0.0
    %v762 = vand.u32 %v717, 4294901760
    %763 = vmatpush1.msra.mxu0 %v762
    %764 = vmatprep.subr.mxu0 0.0
    %v765 = vand.u32 %v718, 4294901760
    %766 = vmatpush1.msra.mxu0 %v765
    %767 = vmatprep.subr.mxu0 0.0
    %768 = vmatpush1.msra.mxu0 0.0
    %769 = vmatprep.subr.mxu0 0.0
    %770 = vmatpush1.msra.mxu0 0.0
    %771 = vmatprep.subr.mxu0 0.0
    %772 = vmatpush1.msra.mxu0 0.0
    %773 = vmatprep.subr.mxu0 0.0
    %774 = vmatpush1.msra.mxu0 0.0
    %775 = vmatprep.subr.mxu0 0.0
    %776 = vmatpush1.msra.mxu0 0.0
    %777 = vmatprep.subr.mxu0 0.0
    %778 = vmatpush1.msra.mxu0 0.0
    %779 = vmatprep.subr.mxu0 0.0
    %780 = vmatpush1.msra.mxu0 0.0
    %781 = vmatprep.subr.mxu0 0.0
    %782 = vmatpush1.msra.mxu0 0.0
    %783 = vmatprep.subr.mxu0 0.0
    %784 = vmatpush1.msra.mxu0 0.0
    %785 = vmatprep.subr.mxu0 0.0
    %786 = vmatpush1.msra.mxu0 0.0
    %787 = vmatprep.subr.mxu0 0.0
    %788 = vmatpush1.msra.mxu0 0.0
    %789 = vmatprep.subr.mxu0 0.0
    %790 = vmatpush1.msra.mxu0 0.0
    %791 = vmatprep.subr.mxu0 0.0
    %792 = vmatpush1.msra.mxu0 0.0
    %793 = vmatprep.subr.mxu0 0.0
    %794 = vmatpush1.msra.mxu0 0.0
    %795 = vmatprep.subr.mxu0 0.0
    %796 = vmatpush1.msra.mxu0 0.0
    %797 = vmatprep.subr.mxu0 0.0
    %798 = vmatpush1.msra.mxu0 0.0
    %799 = vmatprep.mubr.f32.mxu0 0.0
    %v800 = vand.u32 %v43, 4294901760
    %v801 = vsub.f32 %v43, %v800
    %v802 = vand.u32 %v801, 4294901760
    %v803 = vsub.f32 %v801, %v802
    %v804 = vand.u32 %v803, 4294901760
    %805 = vmatmul.mubr.f32.gmra.mrb[0].mxu0 %v804
    %v806 = vpop.f32.mrb[0].mxu0
    %v807 = vadd.f32 %v60, %v806
    %v808 = vpop.f32.mrb[0].mxu0
    %809 = vdwg.mxu0
    %810 = vmatprep.subr.mxu0 0.0
    %v811 = vand.u32 %v703, 4294901760
    %v812 = vsub.f32 %v703, %v811
    %v813 = vand.u32 %v812, 4294901760
    %v814 = vsub.f32 %v812, %v813
    %v815 = vand.u32 %v814, 4294901760
    %816 = vmatpush1.msra.mxu0 %v815
    %817 = vmatprep.subr.mxu0 0.0
    %v818 = vand.u32 %v704, 4294901760
    %v819 = vsub.f32 %v704, %v818
    %v820 = vand.u32 %v819, 4294901760
    %v821 = vsub.f32 %v819, %v820
    %v822 = vand.u32 %v821, 4294901760
    %823 = vmatpush1.msra.mxu0 %v822
    %824 = vmatprep.subr.mxu0 0.0
    %v825 = vand.u32 %v705, 4294901760
    %v826 = vsub.f32 %v705, %v825
    %v827 = vand.u32 %v826, 4294901760
    %v828 = vsub.f32 %v826, %v827
    %v829 = vand.u32 %v828, 4294901760
    %830 = vmatpush1.msra.mxu0 %v829
    %831 = vmatprep.subr.mxu0 0.0
    %v832 = vand.u32 %v706, 4294901760
    %v833 = vsub.f32 %v706, %v832
    %v834 = vand.u32 %v833, 4294901760
    %v835 = vsub.f32 %v833, %v834
    %v836 = vand.u32 %v835, 4294901760
    %837 = vmatpush1.msra.mxu0 %v836
    %838 = vmatprep.subr.mxu0 0.0
    %v839 = vand.u32 %v707, 4294901760
    %v840 = vsub.f32 %v707, %v839
    %v841 = vand.u32 %v840, 4294901760
    %v842 = vsub.f32 %v840, %v841
    %v843 = vand.u32 %v842, 4294901760
    %844 = vmatpush1.msra.mxu0 %v843
    %845 = vmatprep.subr.mxu0 0.0
    %v846 = vand.u32 %v708, 4294901760
    %v847 = vsub.f32 %v708, %v846
    %v848 = vand.u32 %v847, 4294901760
    %v849 = vsub.f32 %v847, %v848
    %v850 = vand.u32 %v849, 4294901760
    %851 = vmatpush1.msra.mxu0 %v850
    %852 = vmatprep.subr.mxu0 0.0
    %v853 = vand.u32 %v709, 4294901760
    %v854 = vsub.f32 %v709, %v853
    %v855 = vand.u32 %v854, 4294901760
    %v856 = vsub.f32 %v854, %v855
    %v857 = vand.u32 %v856, 4294901760
    %858 = vmatpush1.msra.mxu0 %v857
    %859 = vmatprep.subr.mxu0 0.0
    %v860 = vand.u32 %v710, 4294901760
    %v861 = vsub.f32 %v710, %v860
    %v862 = vand.u32 %v861, 4294901760
    %v863 = vsub.f32 %v861, %v862
    %v864 = vand.u32 %v863, 4294901760
    %865 = vmatpush1.msra.mxu0 %v864
    %866 = vmatprep.subr.mxu0 0.0
    %v867 = vand.u32 %v711, 4294901760
    %v868 = vsub.f32 %v711, %v867
    %v869 = vand.u32 %v868, 4294901760
    %v870 = vsub.f32 %v868, %v869
    %v871 = vand.u32 %v870, 4294901760
    %872 = vmatpush1.msra.mxu0 %v871
    %873 = vmatprep.subr.mxu0 0.0
    %v874 = vand.u32 %v712, 4294901760
    %v875 = vsub.f32 %v712, %v874
    %v876 = vand.u32 %v875, 4294901760
    %v877 = vsub.f32 %v875, %v876
    %v878 = vand.u32 %v877, 4294901760
    %879 = vmatpush1.msra.mxu0 %v878
    %880 = vmatprep.subr.mxu0 0.0
    %v881 = vand.u32 %v713, 4294901760
    %v882 = vsub.f32 %v713, %v881
    %v883 = vand.u32 %v882, 4294901760
    %v884 = vsub.f32 %v882, %v883
    %v885 = vand.u32 %v884, 4294901760
    %886 = vmatpush1.msra.mxu0 %v885
    %887 = vmatprep.subr.mxu0 0.0
    %v888 = vand.u32 %v714, 4294901760
    %v889 = vsub.f32 %v714, %v888
    %v890 = vand.u32 %v889, 4294901760
    %v891 = vsub.f32 %v889, %v890
    %v892 = vand.u32 %v891, 4294901760
    %893 = vmatpush1.msra.mxu0 %v892
    %894 = vmatprep.subr.mxu0 0.0
    %v895 = vand.u32 %v715, 4294901760
    %v896 = vsub.f32 %v715, %v895
    %v897 = vand.u32 %v896, 4294901760
    %v898 = vsub.f32 %v896, %v897
    %v899 = vand.u32 %v898, 4294901760
    %900 = vmatpush1.msra.mxu0 %v899
    %901 = vmatprep.subr.mxu0 0.0
    %v902 = vand.u32 %v716, 4294901760
    %v903 = vsub.f32 %v716, %v902
    %v904 = vand.u32 %v903, 4294901760
    %v905 = vsub.f32 %v903, %v904
    %v906 = vand.u32 %v905, 4294901760
    %907 = vmatpush1.msra.mxu0 %v906
    %908 = vmatprep.subr.mxu0 0.0
    %v909 = vand.u32 %v717, 4294901760
    %v910 = vsub.f32 %v717, %v909
    %v911 = vand.u32 %v910, 4294901760
    %v912 = vsub.f32 %v910, %v911
    %v913 = vand.u32 %v912, 4294901760
    %914 = vmatpush1.msra.mxu0 %v913
    %915 = vmatprep.subr.mxu0 0.0
    %v916 = vand.u32 %v718, 4294901760
    %v917 = vsub.f32 %v718, %v916
    %v918 = vand.u32 %v917, 4294901760
    %v919 = vsub.f32 %v917, %v918
    %v920 = vand.u32 %v919, 4294901760
    %921 = vmatpush1.msra.mxu0 %v920
    %922 = vmatprep.subr.mxu0 0.0
    %923 = vmatpush1.msra.mxu0 0.0
    %924 = vmatprep.subr.mxu0 0.0
    %925 = vmatpush1.msra.mxu0 0.0
    %926 = vmatprep.subr.mxu0 0.0
    %927 = vmatpush1.msra.mxu0 0.0
    %928 = vmatprep.subr.mxu0 0.0
    %929 = vmatpush1.msra.mxu0 0.0
    %930 = vmatprep.subr.mxu0 0.0
    %931 = vmatpush1.msra.mxu0 0.0
    %932 = vmatprep.subr.mxu0 0.0
    %933 = vmatpush1.msra.mxu0 0.0
    %934 = vmatprep.subr.mxu0 0.0
    %935 = vmatpush1.msra.mxu0 0.0
    %936 = vmatprep.subr.mxu0 0.0
    %937 = vmatpush1.msra.mxu0 0.0
    %938 = vmatprep.subr.mxu0 0.0
    %939 = vmatpush1.msra.mxu0 0.0
    %940 = vmatprep.subr.mxu0 0.0
    %941 = vmatpush1.msra.mxu0 0.0
    %942 = vmatprep.subr.mxu0 0.0
    %943 = vmatpush1.msra.mxu0 0.0
    %944 = vmatprep.subr.mxu0 0.0
    %945 = vmatpush1.msra.mxu0 0.0
    %946 = vmatprep.subr.mxu0 0.0
    %947 = vmatpush1.msra.mxu0 0.0
    %948 = vmatprep.subr.mxu0 0.0
    %949 = vmatpush1.msra.mxu0 0.0
    %950 = vmatprep.subr.mxu0 0.0
    %951 = vmatpush1.msra.mxu0 0.0
    %952 = vmatprep.subr.mxu0 0.0
    %953 = vmatpush1.msra.mxu0 0.0
    %954 = vmatprep.mubr.f32.mxu0 0.0
    %v955 = vand.u32 %v43, 4294901760
    %956 = vmatmul.mubr.f32.gmra.mrb[0].mxu0 %v955
    %v957 = vpop.f32.mrb[0].mxu0
    %v958 = vadd.f32 %v807, %v957
    %v959 = vpop.f32.mrb[0].mxu0
    %960 = vdwg.mxu0
    %961 = vmatprep.subr.mxu0 0.0
    %v962 = vand.u32 %v703, 4294901760
    %v963 = vsub.f32 %v703, %v962
    %964 = vmatpush1.msra.mxu0 %v963
    %965 = vmatprep.subr.mxu0 0.0
    %v966 = vand.u32 %v704, 4294901760
    %v967 = vsub.f32 %v704, %v966
    %968 = vmatpush1.msra.mxu0 %v967
    %969 = vmatprep.subr.mxu0 0.0
    %v970 = vand.u32 %v705, 4294901760
    %v971 = vsub.f32 %v705, %v970
    %972 = vmatpush1.msra.mxu0 %v971
    %973 = vmatprep.subr.mxu0 0.0
    %v974 = vand.u32 %v706, 4294901760
    %v975 = vsub.f32 %v706, %v974
    %976 = vmatpush1.msra.mxu0 %v975
    %977 = vmatprep.subr.mxu0 0.0
    %v978 = vand.u32 %v707, 4294901760
    %v979 = vsub.f32 %v707, %v978
    %980 = vmatpush1.msra.mxu0 %v979
    %981 = vmatprep.subr.mxu0 0.0
    %v982 = vand.u32 %v708, 4294901760
    %v983 = vsub.f32 %v708, %v982
    %984 = vmatpush1.msra.mxu0 %v983
    %985 = vmatprep.subr.mxu0 0.0
    %v986 = vand.u32 %v709, 4294901760
    %v987 = vsub.f32 %v709, %v986
    %988 = vmatpush1.msra.mxu0 %v987
    %989 = vmatprep.subr.mxu0 0.0
    %v990 = vand.u32 %v710, 4294901760
    %v991 = vsub.f32 %v710, %v990
    %992 = vmatpush1.msra.mxu0 %v991
    %993 = vmatprep.subr.mxu0 0.0
    %v994 = vand.u32 %v711, 4294901760
    %v995 = vsub.f32 %v711, %v994
    %996 = vmatpush1.msra.mxu0 %v995
    %997 = vmatprep.subr.mxu0 0.0
    %v998 = vand.u32 %v712, 4294901760
    %v999 = vsub.f32 %v712, %v998
    %1000 = vmatpush1.msra.mxu0 %v999
    %1001 = vmatprep.subr.mxu0 0.0
    %v1002 = vand.u32 %v713, 4294901760
    %v1003 = vsub.f32 %v713, %v1002
    %1004 = vmatpush1.msra.mxu0 %v1003
    %1005 = vmatprep.subr.mxu0 0.0
    %v1006 = vand.u32 %v714, 4294901760
    %v1007 = vsub.f32 %v714, %v1006
    %1008 = vmatpush1.msra.mxu0 %v1007
    %1009 = vmatprep.subr.mxu0 0.0
    %v1010 = vand.u32 %v715, 4294901760
    %v1011 = vsub.f32 %v715, %v1010
    %1012 = vmatpush1.msra.mxu0 %v1011
    %1013 = vmatprep.subr.mxu0 0.0
    %v1014 = vand.u32 %v716, 4294901760
    %v1015 = vsub.f32 %v716, %v1014
    %1016 = vmatpush1.msra.mxu0 %v1015
    %1017 = vmatprep.subr.mxu0 0.0
    %v1018 = vand.u32 %v717, 4294901760
    %v1019 = vsub.f32 %v717, %v1018
    %1020 = vmatpush1.msra.mxu0 %v1019
    %1021 = vmatprep.subr.mxu0 0.0
    %v1022 = vand.u32 %v718, 4294901760
    %v1023 = vsub.f32 %v718, %v1022
    %1024 = vmatpush1.msra.mxu0 %v1023
    %1025 = vmatprep.subr.mxu0 0.0
    %1026 = vmatpush1.msra.mxu0 0.0
    %1027 = vmatprep.subr.mxu0 0.0
    %1028 = vmatpush1.msra.mxu0 0.0
    %1029 = vmatprep.subr.mxu0 0.0
    %1030 = vmatpush1.msra.mxu0 0.0
    %1031 = vmatprep.subr.mxu0 0.0
    %1032 = vmatpush1.msra.mxu0 0.0
    %1033 = vmatprep.subr.mxu0 0.0
    %1034 = vmatpush1.msra.mxu0 0.0
    %1035 = vmatprep.subr.mxu0 0.0
    %1036 = vmatpush1.msra.mxu0 0.0
    %1037 = vmatprep.subr.mxu0 0.0
    %1038 = vmatpush1.msra.mxu0 0.0
    %1039 = vmatprep.subr.mxu0 0.0
    %1040 = vmatpush1.msra.mxu0 0.0
    %1041 = vmatprep.subr.mxu0 0.0
    %1042 = vmatpush1.msra.mxu0 0.0
    %1043 = vmatprep.subr.mxu0 0.0
    %1044 = vmatpush1.msra.mxu0 0.0
    %1045 = vmatprep.subr.mxu0 0.0
    %1046 = vmatpush1.msra.mxu0 0.0
    %1047 = vmatprep.subr.mxu0 0.0
    %1048 = vmatpush1.msra.mxu0 0.0
    %1049 = vmatprep.subr.mxu0 0.0
    %1050 = vmatpush1.msra.mxu0 0.0
    %1051 = vmatprep.subr.mxu0 0.0
    %1052 = vmatpush1.msra.mxu0 0.0
    %1053 = vmatprep.subr.mxu0 0.0
    %1054 = vmatpush1.msra.mxu0 0.0
    %1055 = vmatprep.subr.mxu0 0.0
    %1056 = vmatpush1.msra.mxu0 0.0
    %1057 = vmatprep.mubr.f32.mxu0 0.0
    %v1058 = vand.u32 %v43, 4294901760
    %v1059 = vsub.f32 %v43, %v1058
    %1060 = vmatmul.mubr.f32.gmra.mrb[0].mxu0 %v1059
    %v1061 = vpop.f32.mrb[0].mxu0
    %v1062 = vadd.f32 %v958, %v1061
    %v1063 = vpop.f32.mrb[0].mxu0
    %1064 = vdwg.mxu0
    %1065 = vmatprep.subr.mxu0 0.0
    %v1066 = vand.u32 %v703, 4294901760
    %1067 = vmatpush1.msra.mxu0 %v1066
    %1068 = vmatprep.subr.mxu0 0.0
    %v1069 = vand.u32 %v704, 4294901760
    %1070 = vmatpush1.msra.mxu0 %v1069
    %1071 = vmatprep.subr.mxu0 0.0
    %v1072 = vand.u32 %v705, 4294901760
    %1073 = vmatpush1.msra.mxu0 %v1072
    %1074 = vmatprep.subr.mxu0 0.0
    %v1075 = vand.u32 %v706, 4294901760
    %1076 = vmatpush1.msra.mxu0 %v1075
    %1077 = vmatprep.subr.mxu0 0.0
    %v1078 = vand.u32 %v707, 4294901760
    %1079 = vmatpush1.msra.mxu0 %v1078
    %1080 = vmatprep.subr.mxu0 0.0
    %v1081 = vand.u32 %v708, 4294901760
    %1082 = vmatpush1.msra.mxu0 %v1081
    %1083 = vmatprep.subr.mxu0 0.0
    %v1084 = vand.u32 %v709, 4294901760
    %1085 = vmatpush1.msra.mxu0 %v1084
    %1086 = vmatprep.subr.mxu0 0.0
    %v1087 = vand.u32 %v710, 4294901760
    %1088 = vmatpush1.msra.mxu0 %v1087
    %1089 = vmatprep.subr.mxu0 0.0
    %v1090 = vand.u32 %v711, 4294901760
    %1091 = vmatpush1.msra.mxu0 %v1090
    %1092 = vmatprep.subr.mxu0 0.0
    %v1093 = vand.u32 %v712, 4294901760
    %1094 = vmatpush1.msra.mxu0 %v1093
    %1095 = vmatprep.subr.mxu0 0.0
    %v1096 = vand.u32 %v713, 4294901760
    %1097 = vmatpush1.msra.mxu0 %v1096
    %1098 = vmatprep.subr.mxu0 0.0
    %v1099 = vand.u32 %v714, 4294901760
    %1100 = vmatpush1.msra.mxu0 %v1099
    %1101 = vmatprep.subr.mxu0 0.0
    %v1102 = vand.u32 %v715, 4294901760
    %1103 = vmatpush1.msra.mxu0 %v1102
    %1104 = vmatprep.subr.mxu0 0.0
    %v1105 = vand.u32 %v716, 4294901760
    %1106 = vmatpush1.msra.mxu0 %v1105
    %1107 = vmatprep.subr.mxu0 0.0
    %v1108 = vand.u32 %v717, 4294901760
    %1109 = vmatpush1.msra.mxu0 %v1108
    %1110 = vmatprep.subr.mxu0 0.0
    %v1111 = vand.u32 %v718, 4294901760
    %1112 = vmatpush1.msra.mxu0 %v1111
    %1113 = vmatprep.subr.mxu0 0.0
    %1114 = vmatpush1.msra.mxu0 0.0
    %1115 = vmatprep.subr.mxu0 0.0
    %1116 = vmatpush1.msra.mxu0 0.0
    %1117 = vmatprep.subr.mxu0 0.0
    %1118 = vmatpush1.msra.mxu0 0.0
    %1119 = vmatprep.subr.mxu0 0.0
    %1120 = vmatpush1.msra.mxu0 0.0
    %1121 = vmatprep.subr.mxu0 0.0
    %1122 = vmatpush1.msra.mxu0 0.0
    %1123 = vmatprep.subr.mxu0 0.0
    %1124 = vmatpush1.msra.mxu0 0.0
    %1125 = vmatprep.subr.mxu0 0.0
    %1126 = vmatpush1.msra.mxu0 0.0
    %1127 = vmatprep.subr.mxu0 0.0
    %1128 = vmatpush1.msra.mxu0 0.0
    %1129 = vmatprep.subr.mxu0 0.0
    %1130 = vmatpush1.msra.mxu0 0.0
    %1131 = vmatprep.subr.mxu0 0.0
    %1132 = vmatpush1.msra.mxu0 0.0
    %1133 = vmatprep.subr.mxu0 0.0
    %1134 = vmatpush1.msra.mxu0 0.0
    %1135 = vmatprep.subr.mxu0 0.0
    %1136 = vmatpush1.msra.mxu0 0.0
    %1137 = vmatprep.subr.mxu0 0.0
    %1138 = vmatpush1.msra.mxu0 0.0
    %1139 = vmatprep.subr.mxu0 0.0
    %1140 = vmatpush1.msra.mxu0 0.0
    %1141 = vmatprep.subr.mxu0 0.0
    %1142 = vmatpush1.msra.mxu0 0.0
    %1143 = vmatprep.subr.mxu0 0.0
    %1144 = vmatpush1.msra.mxu0 0.0
    %1145 = vmatprep.mubr.f32.mxu0 0.0
    %v1146 = vand.u32 %v43, 4294901760
    %v1147 = vsub.f32 %v43, %v1146
    %v1148 = vand.u32 %v1147, 4294901760
    %1149 = vmatmul.mubr.f32.gmra.mrb[0].mxu0 %v1148
    %v1150 = vpop.f32.mrb[0].mxu0
    %v1151 = vadd.f32 %v1062, %v1150
    %v1152 = vpop.f32.mrb[0].mxu0
    %1153 = vdwg.mxu0
    %1154 = vmatprep.subr.mxu0 0.0
    %v1155 = vand.u32 %v703, 4294901760
    %v1156 = vsub.f32 %v703, %v1155
    %v1157 = vand.u32 %v1156, 4294901760
    %1158 = vmatpush1.msra.mxu0 %v1157
    %1159 = vmatprep.subr.mxu0 0.0
    %v1160 = vand.u32 %v704, 4294901760
    %v1161 = vsub.f32 %v704, %v1160
    %v1162 = vand.u32 %v1161, 4294901760
    %1163 = vmatpush1.msra.mxu0 %v1162
    %1164 = vmatprep.subr.mxu0 0.0
    %v1165 = vand.u32 %v705, 4294901760
    %v1166 = vsub.f32 %v705, %v1165
    %v1167 = vand.u32 %v1166, 4294901760
    %1168 = vmatpush1.msra.mxu0 %v1167
    %1169 = vmatprep.subr.mxu0 0.0
    %v1170 = vand.u32 %v706, 4294901760
    %v1171 = vsub.f32 %v706, %v1170
    %v1172 = vand.u32 %v1171, 4294901760
    %1173 = vmatpush1.msra.mxu0 %v1172
    %1174 = vmatprep.subr.mxu0 0.0
    %v1175 = vand.u32 %v707, 4294901760
    %v1176 = vsub.f32 %v707, %v1175
    %v1177 = vand.u32 %v1176, 4294901760
    %1178 = vmatpush1.msra.mxu0 %v1177
    %1179 = vmatprep.subr.mxu0 0.0
    %v1180 = vand.u32 %v708, 4294901760
    %v1181 = vsub.f32 %v708, %v1180
    %v1182 = vand.u32 %v1181, 4294901760
    %1183 = vmatpush1.msra.mxu0 %v1182
    %1184 = vmatprep.subr.mxu0 0.0
    %v1185 = vand.u32 %v709, 4294901760
    %v1186 = vsub.f32 %v709, %v1185
    %v1187 = vand.u32 %v1186, 4294901760
    %1188 = vmatpush1.msra.mxu0 %v1187
    %1189 = vmatprep.subr.mxu0 0.0
    %v1190 = vand.u32 %v710, 4294901760
    %v1191 = vsub.f32 %v710, %v1190
    %v1192 = vand.u32 %v1191, 4294901760
    %1193 = vmatpush1.msra.mxu0 %v1192
    %1194 = vmatprep.subr.mxu0 0.0
    %v1195 = vand.u32 %v711, 4294901760
    %v1196 = vsub.f32 %v711, %v1195
    %v1197 = vand.u32 %v1196, 4294901760
    %1198 = vmatpush1.msra.mxu0 %v1197
    %1199 = vmatprep.subr.mxu0 0.0
    %v1200 = vand.u32 %v712, 4294901760
    %v1201 = vsub.f32 %v712, %v1200
    %v1202 = vand.u32 %v1201, 4294901760
    %1203 = vmatpush1.msra.mxu0 %v1202
    %1204 = vmatprep.subr.mxu0 0.0
    %v1205 = vand.u32 %v713, 4294901760
    %v1206 = vsub.f32 %v713, %v1205
    %v1207 = vand.u32 %v1206, 4294901760
    %1208 = vmatpush1.msra.mxu0 %v1207
    %1209 = vmatprep.subr.mxu0 0.0
    %v1210 = vand.u32 %v714, 4294901760
    %v1211 = vsub.f32 %v714, %v1210
    %v1212 = vand.u32 %v1211, 4294901760
    %1213 = vmatpush1.msra.mxu0 %v1212
    %1214 = vmatprep.subr.mxu0 0.0
    %v1215 = vand.u32 %v715, 4294901760
    %v1216 = vsub.f32 %v715, %v1215
    %v1217 = vand.u32 %v1216, 4294901760
    %1218 = vmatpush1.msra.mxu0 %v1217
    %1219 = vmatprep.subr.mxu0 0.0
    %v1220 = vand.u32 %v716, 4294901760
    %v1221 = vsub.f32 %v716, %v1220
    %v1222 = vand.u32 %v1221, 4294901760
    %1223 = vmatpush1.msra.mxu0 %v1222
    %1224 = vmatprep.subr.mxu0 0.0
    %v1225 = vand.u32 %v717, 4294901760
    %v1226 = vsub.f32 %v717, %v1225
    %v1227 = vand.u32 %v1226, 4294901760
    %1228 = vmatpush1.msra.mxu0 %v1227
    %1229 = vmatprep.subr.mxu0 0.0
    %v1230 = vand.u32 %v718, 4294901760
    %v1231 = vsub.f32 %v718, %v1230
    %v1232 = vand.u32 %v1231, 4294901760
    %1233 = vmatpush1.msra.mxu0 %v1232
    %1234 = vmatprep.subr.mxu0 0.0
    %1235 = vmatpush1.msra.mxu0 0.0
    %1236 = vmatprep.subr.mxu0 0.0
    %1237 = vmatpush1.msra.mxu0 0.0
    %1238 = vmatprep.subr.mxu0 0.0
    %1239 = vmatpush1.msra.mxu0 0.0
    %1240 = vmatprep.subr.mxu0 0.0
    %1241 = vmatpush1.msra.mxu0 0.0
    %1242 = vmatprep.subr.mxu0 0.0
    %1243 = vmatpush1.msra.mxu0 0.0
    %1244 = vmatprep.subr.mxu0 0.0
    %1245 = vmatpush1.msra.mxu0 0.0
    %1246 = vmatprep.subr.mxu0 0.0
    %1247 = vmatpush1.msra.mxu0 0.0
    %1248 = vmatprep.subr.mxu0 0.0
    %1249 = vmatpush1.msra.mxu0 0.0
    %1250 = vmatprep.subr.mxu0 0.0
    %1251 = vmatpush1.msra.mxu0 0.0
    %1252 = vmatprep.subr.mxu0 0.0
    %1253 = vmatpush1.msra.mxu0 0.0
    %1254 = vmatprep.subr.mxu0 0.0
    %1255 = vmatpush1.msra.mxu0 0.0
    %1256 = vmatprep.subr.mxu0 0.0
    %1257 = vmatpush1.msra.mxu0 0.0
    %1258 = vmatprep.subr.mxu0 0.0
    %1259 = vmatpush1.msra.mxu0 0.0
    %1260 = vmatprep.subr.mxu0 0.0
    %1261 = vmatpush1.msra.mxu0 0.0
    %1262 = vmatprep.subr.mxu0 0.0
    %1263 = vmatpush1.msra.mxu0 0.0
    %1264 = vmatprep.subr.mxu0 0.0
    %1265 = vmatpush1.msra.mxu0 0.0
    %1266 = vmatprep.mubr.f32.mxu0 0.0
    %v1267 = vand.u32 %v43, 4294901760
    %1268 = vmatmul.mubr.f32.gmra.mrb[0].mxu0 %v1267
    %v1269 = vpop.f32.mrb[0].mxu0
    %v1270 = vadd.f32 %v1151, %v1269
    %v1271 = vpop.f32.mrb[0].mxu0
    %1272 = vdwg.mxu0
    %1273 = vmatprep.subr.mxu0 0.0
    %v1274 = vand.u32 %v703, 4294901760
    %1275 = vmatpush1.msra.mxu0 %v1274
    %1276 = vmatprep.subr.mxu0 0.0
    %v1277 = vand.u32 %v704, 4294901760
    %1278 = vmatpush1.msra.mxu0 %v1277
    %1279 = vmatprep.subr.mxu0 0.0
    %v1280 = vand.u32 %v705, 4294901760
    %1281 = vmatpush1.msra.mxu0 %v1280
    %1282 = vmatprep.subr.mxu0 0.0
    %v1283 = vand.u32 %v706, 4294901760
    %1284 = vmatpush1.msra.mxu0 %v1283
    %1285 = vmatprep.subr.mxu0 0.0
    %v1286 = vand.u32 %v707, 4294901760
    %1287 = vmatpush1.msra.mxu0 %v1286
    %1288 = vmatprep.subr.mxu0 0.0
    %v1289 = vand.u32 %v708, 4294901760
    %1290 = vmatpush1.msra.mxu0 %v1289
    %1291 = vmatprep.subr.mxu0 0.0
    %v1292 = vand.u32 %v709, 4294901760
    %1293 = vmatpush1.msra.mxu0 %v1292
    %1294 = vmatprep.subr.mxu0 0.0
    %v1295 = vand.u32 %v710, 4294901760
    %1296 = vmatpush1.msra.mxu0 %v1295
    %1297 = vmatprep.subr.mxu0 0.0
    %v1298 = vand.u32 %v711, 4294901760
    %1299 = vmatpush1.msra.mxu0 %v1298
    %1300 = vmatprep.subr.mxu0 0.0
    %v1301 = vand.u32 %v712, 4294901760
    %1302 = vmatpush1.msra.mxu0 %v1301
    %1303 = vmatprep.subr.mxu0 0.0
    %v1304 = vand.u32 %v713, 4294901760
    %1305 = vmatpush1.msra.mxu0 %v1304
    %1306 = vmatprep.subr.mxu0 0.0
    %v1307 = vand.u32 %v714, 4294901760
    %1308 = vmatpush1.msra.mxu0 %v1307
    %1309 = vmatprep.subr.mxu0 0.0
    %v1310 = vand.u32 %v715, 4294901760
    %1311 = vmatpush1.msra.mxu0 %v1310
    %1312 = vmatprep.subr.mxu0 0.0
    %v1313 = vand.u32 %v716, 4294901760
    %1314 = vmatpush1.msra.mxu0 %v1313
    %1315 = vmatprep.subr.mxu0 0.0
    %v1316 = vand.u32 %v717, 4294901760
    %1317 = vmatpush1.msra.mxu0 %v1316
    %1318 = vmatprep.subr.mxu0 0.0
    %v1319 = vand.u32 %v718, 4294901760
    %1320 = vmatpush1.msra.mxu0 %v1319
    %1321 = vmatprep.subr.mxu0 0.0
    %1322 = vmatpush1.msra.mxu0 0.0
    %1323 = vmatprep.subr.mxu0 0.0
    %1324 = vmatpush1.msra.mxu0 0.0
    %1325 = vmatprep.subr.mxu0 0.0
    %1326 = vmatpush1.msra.mxu0 0.0
    %1327 = vmatprep.subr.mxu0 0.0
    %1328 = vmatpush1.msra.mxu0 0.0
    %1329 = vmatprep.subr.mxu0 0.0
    %1330 = vmatpush1.msra.mxu0 0.0
    %1331 = vmatprep.subr.mxu0 0.0
    %1332 = vmatpush1.msra.mxu0 0.0
    %1333 = vmatprep.subr.mxu0 0.0
    %1334 = vmatpush1.msra.mxu0 0.0
    %1335 = vmatprep.subr.mxu0 0.0
    %1336 = vmatpush1.msra.mxu0 0.0
    %1337 = vmatprep.subr.mxu0 0.0
    %1338 = vmatpush1.msra.mxu0 0.0
    %1339 = vmatprep.subr.mxu0 0.0
    %1340 = vmatpush1.msra.mxu0 0.0
    %1341 = vmatprep.subr.mxu0 0.0
    %1342 = vmatpush1.msra.mxu0 0.0
    %1343 = vmatprep.subr.mxu0 0.0
    %1344 = vmatpush1.msra.mxu0 0.0
    %1345 = vmatprep.subr.mxu0 0.0
    %1346 = vmatpush1.msra.mxu0 0.0
    %1347 = vmatprep.subr.mxu0 0.0
    %1348 = vmatpush1.msra.mxu0 0.0
    %1349 = vmatprep.subr.mxu0 0.0
    %1350 = vmatpush1.msra.mxu0 0.0
    %1351 = vmatprep.subr.mxu0 0.0
    %1352 = vmatpush1.msra.mxu0 0.0
    %1353 = vmatprep.mubr.f32.mxu0 0.0
    %v1354 = vand.u32 %v43, 4294901760
    %1355 = vmatmul.mubr.f32.gmra.mrb[0].mxu0 %v1354
    %v1356 = vpop.f32.mrb[0].mxu0
    %v1357 = vadd.f32 %v1270, %v1356
    %v1358 = vpop.f32.mrb[0].mxu0
    %1359 = vdwg.mxu0
    %1360 = vst [vmem:[#allocation8 + $0x8] sm:$0xff] %v1357
    %v1361 = vld [vmem:[#allocation6 + $0x10] sm:$0xff]
    %v1362 = vld [vmem:[#allocation6 + $0x30] sm:$0xff]
    %v1363 = vld [vmem:[#allocation6 + $0x50] sm:$0xff]
    %v1364 = vld [vmem:[#allocation6 + $0x70] sm:$0xff]
    %v1365 = vld [vmem:[#allocation6 + $0x90] sm:$0xff]
    %v1366 = vld [vmem:[#allocation6 + $0xb0] sm:$0xff]
    %v1367 = vld [vmem:[#allocation6 + $0xd0] sm:$0xff]
    %v1368 = vld [vmem:[#allocation6 + $0xf0] sm:$0xff]
    %v1369 = vld [vmem:[#allocation6 + $0x110] sm:$0xff]
    %v1370 = vld [vmem:[#allocation6 + $0x130] sm:$0xff]
    %v1371 = vld [vmem:[#allocation6 + $0x150] sm:$0xff]
    %v1372 = vld [vmem:[#allocation6 + $0x170] sm:$0xff]
    %v1373 = vld [vmem:[#allocation6 + $0x190] sm:$0xff]
    %v1374 = vld [vmem:[#allocation6 + $0x1b0] sm:$0xff]
    %v1375 = vld [vmem:[#allocation6 + $0x1d0] sm:$0xff]
    %v1376 = vld [vmem:[#allocation6 + $0x1f0] sm:$0xff]
    %1377 = vmatprep.subr.mxu0 0.0
    %v1378 = vand.u32 %v1361, 4294901760
    %1379 = vmatpush1.msra.mxu0 %v1378
    %1380 = vmatprep.subr.mxu0 0.0
    %v1381 = vand.u32 %v1362, 4294901760
    %1382 = vmatpush1.msra.mxu0 %v1381
    %1383 = vmatprep.subr.mxu0 0.0
    %v1384 = vand.u32 %v1363, 4294901760
    %1385 = vmatpush1.msra.mxu0 %v1384
    %1386 = vmatprep.subr.mxu0 0.0
    %v1387 = vand.u32 %v1364, 4294901760
    %1388 = vmatpush1.msra.mxu0 %v1387
    %1389 = vmatprep.subr.mxu0 0.0
    %v1390 = vand.u32 %v1365, 4294901760
    %1391 = vmatpush1.msra.mxu0 %v1390
    %1392 = vmatprep.subr.mxu0 0.0
    %v1393 = vand.u32 %v1366, 4294901760
    %1394 = vmatpush1.msra.mxu0 %v1393
    %1395 = vmatprep.subr.mxu0 0.0
    %v1396 = vand.u32 %v1367, 4294901760
    %1397 = vmatpush1.msra.mxu0 %v1396
    %1398 = vmatprep.subr.mxu0 0.0
    %v1399 = vand.u32 %v1368, 4294901760
    %1400 = vmatpush1.msra.mxu0 %v1399
    %1401 = vmatprep.subr.mxu0 0.0
    %v1402 = vand.u32 %v1369, 4294901760
    %1403 = vmatpush1.msra.mxu0 %v1402
    %1404 = vmatprep.subr.mxu0 0.0
    %v1405 = vand.u32 %v1370, 4294901760
    %1406 = vmatpush1.msra.mxu0 %v1405
    %1407 = vmatprep.subr.mxu0 0.0
    %v1408 = vand.u32 %v1371, 4294901760
    %1409 = vmatpush1.msra.mxu0 %v1408
    %1410 = vmatprep.subr.mxu0 0.0
    %v1411 = vand.u32 %v1372, 4294901760
    %1412 = vmatpush1.msra.mxu0 %v1411
    %1413 = vmatprep.subr.mxu0 0.0
    %v1414 = vand.u32 %v1373, 4294901760
    %1415 = vmatpush1.msra.mxu0 %v1414
    %1416 = vmatprep.subr.mxu0 0.0
    %v1417 = vand.u32 %v1374, 4294901760
    %1418 = vmatpush1.msra.mxu0 %v1417
    %1419 = vmatprep.subr.mxu0 0.0
    %v1420 = vand.u32 %v1375, 4294901760
    %1421 = vmatpush1.msra.mxu0 %v1420
    %1422 = vmatprep.subr.mxu0 0.0
    %v1423 = vand.u32 %v1376, 4294901760
    %1424 = vmatpush1.msra.mxu0 %v1423
    %1425 = vmatprep.subr.mxu0 0.0
    %1426 = vmatpush1.msra.mxu0 0.0
    %1427 = vmatprep.subr.mxu0 0.0
    %1428 = vmatpush1.msra.mxu0 0.0
    %1429 = vmatprep.subr.mxu0 0.0
    %1430 = vmatpush1.msra.mxu0 0.0
    %1431 = vmatprep.subr.mxu0 0.0
    %1432 = vmatpush1.msra.mxu0 0.0
    %1433 = vmatprep.subr.mxu0 0.0
    %1434 = vmatpush1.msra.mxu0 0.0
    %1435 = vmatprep.subr.mxu0 0.0
    %1436 = vmatpush1.msra.mxu0 0.0
    %1437 = vmatprep.subr.mxu0 0.0
    %1438 = vmatpush1.msra.mxu0 0.0
    %1439 = vmatprep.subr.mxu0 0.0
    %1440 = vmatpush1.msra.mxu0 0.0
    %1441 = vmatprep.subr.mxu0 0.0
    %1442 = vmatpush1.msra.mxu0 0.0
    %1443 = vmatprep.subr.mxu0 0.0
    %1444 = vmatpush1.msra.mxu0 0.0
    %1445 = vmatprep.subr.mxu0 0.0
    %1446 = vmatpush1.msra.mxu0 0.0
    %1447 = vmatprep.subr.mxu0 0.0
    %1448 = vmatpush1.msra.mxu0 0.0
    %1449 = vmatprep.subr.mxu0 0.0
    %1450 = vmatpush1.msra.mxu0 0.0
    %1451 = vmatprep.subr.mxu0 0.0
    %1452 = vmatpush1.msra.mxu0 0.0
    %1453 = vmatprep.subr.mxu0 0.0
    %1454 = vmatpush1.msra.mxu0 0.0
    %1455 = vmatprep.subr.mxu0 0.0
    %1456 = vmatpush1.msra.mxu0 0.0
    %1457 = vmatprep.mubr.f32.mxu0 0.0
    %v1458 = vand.u32 %v43, 4294901760
    %v1459 = vsub.f32 %v43, %v1458
    %v1460 = vand.u32 %v1459, 4294901760
    %v1461 = vsub.f32 %v1459, %v1460
    %v1462 = vand.u32 %v1461, 4294901760
    %1463 = vmatmul.mubr.f32.gmra.mrb[0].mxu0 %v1462
    %v1464 = vpop.f32.mrb[0].mxu0
    %v1465 = vadd.f32 %v60, %v1464
    %v1466 = vpop.f32.mrb[0].mxu0
    %1467 = vdwg.mxu0
    %1468 = vmatprep.subr.mxu0 0.0
    %v1469 = vand.u32 %v1361, 4294901760
    %v1470 = vsub.f32 %v1361, %v1469
    %v1471 = vand.u32 %v1470, 4294901760
    %v1472 = vsub.f32 %v1470, %v1471
    %v1473 = vand.u32 %v1472, 4294901760
    %1474 = vmatpush1.msra.mxu0 %v1473
    %1475 = vmatprep.subr.mxu0 0.0
    %v1476 = vand.u32 %v1362, 4294901760
    %v1477 = vsub.f32 %v1362, %v1476
    %v1478 = vand.u32 %v1477, 4294901760
    %v1479 = vsub.f32 %v1477, %v1478
    %v1480 = vand.u32 %v1479, 4294901760
    %1481 = vmatpush1.msra.mxu0 %v1480
    %1482 = vmatprep.subr.mxu0 0.0
    %v1483 = vand.u32 %v1363, 4294901760
    %v1484 = vsub.f32 %v1363, %v1483
    %v1485 = vand.u32 %v1484, 4294901760
    %v1486 = vsub.f32 %v1484, %v1485
    %v1487 = vand.u32 %v1486, 4294901760
    %1488 = vmatpush1.msra.mxu0 %v1487
    %1489 = vmatprep.subr.mxu0 0.0
    %v1490 = vand.u32 %v1364, 4294901760
    %v1491 = vsub.f32 %v1364, %v1490
    %v1492 = vand.u32 %v1491, 4294901760
    %v1493 = vsub.f32 %v1491, %v1492
    %v1494 = vand.u32 %v1493, 4294901760
    %1495 = vmatpush1.msra.mxu0 %v1494
    %1496 = vmatprep.subr.mxu0 0.0
    %v1497 = vand.u32 %v1365, 4294901760
    %v1498 = vsub.f32 %v1365, %v1497
    %v1499 = vand.u32 %v1498, 4294901760
    %v1500 = vsub.f32 %v1498, %v1499
    %v1501 = vand.u32 %v1500, 4294901760
    %1502 = vmatpush1.msra.mxu0 %v1501
    %1503 = vmatprep.subr.mxu0 0.0
    %v1504 = vand.u32 %v1366, 4294901760
    %v1505 = vsub.f32 %v1366, %v1504
    %v1506 = vand.u32 %v1505, 4294901760
    %v1507 = vsub.f32 %v1505, %v1506
    %v1508 = vand.u32 %v1507, 4294901760
    %1509 = vmatpush1.msra.mxu0 %v1508
    %1510 = vmatprep.subr.mxu0 0.0
    %v1511 = vand.u32 %v1367, 4294901760
    %v1512 = vsub.f32 %v1367, %v1511
    %v1513 = vand.u32 %v1512, 4294901760
    %v1514 = vsub.f32 %v1512, %v1513
    %v1515 = vand.u32 %v1514, 4294901760
    %1516 = vmatpush1.msra.mxu0 %v1515
    %1517 = vmatprep.subr.mxu0 0.0
    %v1518 = vand.u32 %v1368, 4294901760
    %v1519 = vsub.f32 %v1368, %v1518
    %v1520 = vand.u32 %v1519, 4294901760
    %v1521 = vsub.f32 %v1519, %v1520
    %v1522 = vand.u32 %v1521, 4294901760
    %1523 = vmatpush1.msra.mxu0 %v1522
    %1524 = vmatprep.subr.mxu0 0.0
    %v1525 = vand.u32 %v1369, 4294901760
    %v1526 = vsub.f32 %v1369, %v1525
    %v1527 = vand.u32 %v1526, 4294901760
    %v1528 = vsub.f32 %v1526, %v1527
    %v1529 = vand.u32 %v1528, 4294901760
    %1530 = vmatpush1.msra.mxu0 %v1529
    %1531 = vmatprep.subr.mxu0 0.0
    %v1532 = vand.u32 %v1370, 4294901760
    %v1533 = vsub.f32 %v1370, %v1532
    %v1534 = vand.u32 %v1533, 4294901760
    %v1535 = vsub.f32 %v1533, %v1534
    %v1536 = vand.u32 %v1535, 4294901760
    %1537 = vmatpush1.msra.mxu0 %v1536
    %1538 = vmatprep.subr.mxu0 0.0
    %v1539 = vand.u32 %v1371, 4294901760
    %v1540 = vsub.f32 %v1371, %v1539
    %v1541 = vand.u32 %v1540, 4294901760
    %v1542 = vsub.f32 %v1540, %v1541
    %v1543 = vand.u32 %v1542, 4294901760
    %1544 = vmatpush1.msra.mxu0 %v1543
    %1545 = vmatprep.subr.mxu0 0.0
    %v1546 = vand.u32 %v1372, 4294901760
    %v1547 = vsub.f32 %v1372, %v1546
    %v1548 = vand.u32 %v1547, 4294901760
    %v1549 = vsub.f32 %v1547, %v1548
    %v1550 = vand.u32 %v1549, 4294901760
    %1551 = vmatpush1.msra.mxu0 %v1550
    %1552 = vmatprep.subr.mxu0 0.0
    %v1553 = vand.u32 %v1373, 4294901760
    %v1554 = vsub.f32 %v1373, %v1553
    %v1555 = vand.u32 %v1554, 4294901760
    %v1556 = vsub.f32 %v1554, %v1555
    %v1557 = vand.u32 %v1556, 4294901760
    %1558 = vmatpush1.msra.mxu0 %v1557
    %1559 = vmatprep.subr.mxu0 0.0
    %v1560 = vand.u32 %v1374, 4294901760
    %v1561 = vsub.f32 %v1374, %v1560
    %v1562 = vand.u32 %v1561, 4294901760
    %v1563 = vsub.f32 %v1561, %v1562
    %v1564 = vand.u32 %v1563, 4294901760
    %1565 = vmatpush1.msra.mxu0 %v1564
    %1566 = vmatprep.subr.mxu0 0.0
    %v1567 = vand.u32 %v1375, 4294901760
    %v1568 = vsub.f32 %v1375, %v1567
    %v1569 = vand.u32 %v1568, 4294901760
    %v1570 = vsub.f32 %v1568, %v1569
    %v1571 = vand.u32 %v1570, 4294901760
    %1572 = vmatpush1.msra.mxu0 %v1571
    %1573 = vmatprep.subr.mxu0 0.0
    %v1574 = vand.u32 %v1376, 4294901760
    %v1575 = vsub.f32 %v1376, %v1574
    %v1576 = vand.u32 %v1575, 4294901760
    %v1577 = vsub.f32 %v1575, %v1576
    %v1578 = vand.u32 %v1577, 4294901760
    %1579 = vmatpush1.msra.mxu0 %v1578
    %1580 = vmatprep.subr.mxu0 0.0
    %1581 = vmatpush1.msra.mxu0 0.0
    %1582 = vmatprep.subr.mxu0 0.0
    %1583 = vmatpush1.msra.mxu0 0.0
    %1584 = vmatprep.subr.mxu0 0.0
    %1585 = vmatpush1.msra.mxu0 0.0
    %1586 = vmatprep.subr.mxu0 0.0
    %1587 = vmatpush1.msra.mxu0 0.0
    %1588 = vmatprep.subr.mxu0 0.0
    %1589 = vmatpush1.msra.mxu0 0.0
    %1590 = vmatprep.subr.mxu0 0.0
    %1591 = vmatpush1.msra.mxu0 0.0
    %1592 = vmatprep.subr.mxu0 0.0
    %1593 = vmatpush1.msra.mxu0 0.0
    %1594 = vmatprep.subr.mxu0 0.0
    %1595 = vmatpush1.msra.mxu0 0.0
    %1596 = vmatprep.subr.mxu0 0.0
    %1597 = vmatpush1.msra.mxu0 0.0
    %1598 = vmatprep.subr.mxu0 0.0
    %1599 = vmatpush1.msra.mxu0 0.0
    %1600 = vmatprep.subr.mxu0 0.0
    %1601 = vmatpush1.msra.mxu0 0.0
    %1602 = vmatprep.subr.mxu0 0.0
    %1603 = vmatpush1.msra.mxu0 0.0
    %1604 = vmatprep.subr.mxu0 0.0
    %1605 = vmatpush1.msra.mxu0 0.0
    %1606 = vmatprep.subr.mxu0 0.0
    %1607 = vmatpush1.msra.mxu0 0.0
    %1608 = vmatprep.subr.mxu0 0.0
    %1609 = vmatpush1.msra.mxu0 0.0
    %1610 = vmatprep.subr.mxu0 0.0
    %1611 = vmatpush1.msra.mxu0 0.0
    %1612 = vmatprep.mubr.f32.mxu0 0.0
    %v1613 = vand.u32 %v43, 4294901760
    %1614 = vmatmul.mubr.f32.gmra.mrb[0].mxu0 %v1613
    %v1615 = vpop.f32.mrb[0].mxu0
    %v1616 = vadd.f32 %v1465, %v1615
    %v1617 = vpop.f32.mrb[0].mxu0
    %1618 = vdwg.mxu0
    %1619 = vmatprep.subr.mxu0 0.0
    %v1620 = vand.u32 %v1361, 4294901760
    %v1621 = vsub.f32 %v1361, %v1620
    %1622 = vmatpush1.msra.mxu0 %v1621
    %1623 = vmatprep.subr.mxu0 0.0
    %v1624 = vand.u32 %v1362, 4294901760
    %v1625 = vsub.f32 %v1362, %v1624
    %1626 = vmatpush1.msra.mxu0 %v1625
    %1627 = vmatprep.subr.mxu0 0.0
    %v1628 = vand.u32 %v1363, 4294901760
    %v1629 = vsub.f32 %v1363, %v1628
    %1630 = vmatpush1.msra.mxu0 %v1629
    %1631 = vmatprep.subr.mxu0 0.0
    %v1632 = vand.u32 %v1364, 4294901760
    %v1633 = vsub.f32 %v1364, %v1632
    %1634 = vmatpush1.msra.mxu0 %v1633
    %1635 = vmatprep.subr.mxu0 0.0
    %v1636 = vand.u32 %v1365, 4294901760
    %v1637 = vsub.f32 %v1365, %v1636
    %1638 = vmatpush1.msra.mxu0 %v1637
    %1639 = vmatprep.subr.mxu0 0.0
    %v1640 = vand.u32 %v1366, 4294901760
    %v1641 = vsub.f32 %v1366, %v1640
    %1642 = vmatpush1.msra.mxu0 %v1641
    %1643 = vmatprep.subr.mxu0 0.0
    %v1644 = vand.u32 %v1367, 4294901760
    %v1645 = vsub.f32 %v1367, %v1644
    %1646 = vmatpush1.msra.mxu0 %v1645
    %1647 = vmatprep.subr.mxu0 0.0
    %v1648 = vand.u32 %v1368, 4294901760
    %v1649 = vsub.f32 %v1368, %v1648
    %1650 = vmatpush1.msra.mxu0 %v1649
    %1651 = vmatprep.subr.mxu0 0.0
    %v1652 = vand.u32 %v1369, 4294901760
    %v1653 = vsub.f32 %v1369, %v1652
    %1654 = vmatpush1.msra.mxu0 %v1653
    %1655 = vmatprep.subr.mxu0 0.0
    %v1656 = vand.u32 %v1370, 4294901760
    %v1657 = vsub.f32 %v1370, %v1656
    %1658 = vmatpush1.msra.mxu0 %v1657
    %1659 = vmatprep.subr.mxu0 0.0
    %v1660 = vand.u32 %v1371, 4294901760
    %v1661 = vsub.f32 %v1371, %v1660
    %1662 = vmatpush1.msra.mxu0 %v1661
    %1663 = vmatprep.subr.mxu0 0.0
    %v1664 = vand.u32 %v1372, 4294901760
    %v1665 = vsub.f32 %v1372, %v1664
    %1666 = vmatpush1.msra.mxu0 %v1665
    %1667 = vmatprep.subr.mxu0 0.0
    %v1668 = vand.u32 %v1373, 4294901760
    %v1669 = vsub.f32 %v1373, %v1668
    %1670 = vmatpush1.msra.mxu0 %v1669
    %1671 = vmatprep.subr.mxu0 0.0
    %v1672 = vand.u32 %v1374, 4294901760
    %v1673 = vsub.f32 %v1374, %v1672
    %1674 = vmatpush1.msra.mxu0 %v1673
    %1675 = vmatprep.subr.mxu0 0.0
    %v1676 = vand.u32 %v1375, 4294901760
    %v1677 = vsub.f32 %v1375, %v1676
    %1678 = vmatpush1.msra.mxu0 %v1677
    %1679 = vmatprep.subr.mxu0 0.0
    %v1680 = vand.u32 %v1376, 4294901760
    %v1681 = vsub.f32 %v1376, %v1680
    %1682 = vmatpush1.msra.mxu0 %v1681
    %1683 = vmatprep.subr.mxu0 0.0
    %1684 = vmatpush1.msra.mxu0 0.0
    %1685 = vmatprep.subr.mxu0 0.0
    %1686 = vmatpush1.msra.mxu0 0.0
    %1687 = vmatprep.subr.mxu0 0.0
    %1688 = vmatpush1.msra.mxu0 0.0
    %1689 = vmatprep.subr.mxu0 0.0
    %1690 = vmatpush1.msra.mxu0 0.0
    %1691 = vmatprep.subr.mxu0 0.0
    %1692 = vmatpush1.msra.mxu0 0.0
    %1693 = vmatprep.subr.mxu0 0.0
    %1694 = vmatpush1.msra.mxu0 0.0
    %1695 = vmatprep.subr.mxu0 0.0
    %1696 = vmatpush1.msra.mxu0 0.0
    %1697 = vmatprep.subr.mxu0 0.0
    %1698 = vmatpush1.msra.mxu0 0.0
    %1699 = vmatprep.subr.mxu0 0.0
    %1700 = vmatpush1.msra.mxu0 0.0
    %1701 = vmatprep.subr.mxu0 0.0
    %1702 = vmatpush1.msra.mxu0 0.0
    %1703 = vmatprep.subr.mxu0 0.0
    %1704 = vmatpush1.msra.mxu0 0.0
    %1705 = vmatprep.subr.mxu0 0.0
    %1706 = vmatpush1.msra.mxu0 0.0
    %1707 = vmatprep.subr.mxu0 0.0
    %1708 = vmatpush1.msra.mxu0 0.0
    %1709 = vmatprep.subr.mxu0 0.0
    %1710 = vmatpush1.msra.mxu0 0.0
    %1711 = vmatprep.subr.mxu0 0.0
    %1712 = vmatpush1.msra.mxu0 0.0
    %1713 = vmatprep.subr.mxu0 0.0
    %1714 = vmatpush1.msra.mxu0 0.0
    %1715 = vmatprep.mubr.f32.mxu0 0.0
    %v1716 = vand.u32 %v43, 4294901760
    %v1717 = vsub.f32 %v43, %v1716
    %1718 = vmatmul.mubr.f32.gmra.mrb[0].mxu0 %v1717
    %v1719 = vpop.f32.mrb[0].mxu0
    %v1720 = vadd.f32 %v1616, %v1719
    %v1721 = vpop.f32.mrb[0].mxu0
    %1722 = vdwg.mxu0
    %1723 = vmatprep.subr.mxu0 0.0
    %v1724 = vand.u32 %v1361, 4294901760
    %1725 = vmatpush1.msra.mxu0 %v1724
    %1726 = vmatprep.subr.mxu0 0.0
    %v1727 = vand.u32 %v1362, 4294901760
    %1728 = vmatpush1.msra.mxu0 %v1727
    %1729 = vmatprep.subr.mxu0 0.0
    %v1730 = vand.u32 %v1363, 4294901760
    %1731 = vmatpush1.msra.mxu0 %v1730
    %1732 = vmatprep.subr.mxu0 0.0
    %v1733 = vand.u32 %v1364, 4294901760
    %1734 = vmatpush1.msra.mxu0 %v1733
    %1735 = vmatprep.subr.mxu0 0.0
    %v1736 = vand.u32 %v1365, 4294901760
    %1737 = vmatpush1.msra.mxu0 %v1736
    %1738 = vmatprep.subr.mxu0 0.0
    %v1739 = vand.u32 %v1366, 4294901760
    %1740 = vmatpush1.msra.mxu0 %v1739
    %1741 = vmatprep.subr.mxu0 0.0
    %v1742 = vand.u32 %v1367, 4294901760
    %1743 = vmatpush1.msra.mxu0 %v1742
    %1744 = vmatprep.subr.mxu0 0.0
    %v1745 = vand.u32 %v1368, 4294901760
    %1746 = vmatpush1.msra.mxu0 %v1745
    %1747 = vmatprep.subr.mxu0 0.0
    %v1748 = vand.u32 %v1369, 4294901760
    %1749 = vmatpush1.msra.mxu0 %v1748
    %1750 = vmatprep.subr.mxu0 0.0
    %v1751 = vand.u32 %v1370, 4294901760
    %1752 = vmatpush1.msra.mxu0 %v1751
    %1753 = vmatprep.subr.mxu0 0.0
    %v1754 = vand.u32 %v1371, 4294901760
    %1755 = vmatpush1.msra.mxu0 %v1754
    %1756 = vmatprep.subr.mxu0 0.0
    %v1757 = vand.u32 %v1372, 4294901760
    %1758 = vmatpush1.msra.mxu0 %v1757
    %1759 = vmatprep.subr.mxu0 0.0
    %v1760 = vand.u32 %v1373, 4294901760
    %1761 = vmatpush1.msra.mxu0 %v1760
    %1762 = vmatprep.subr.mxu0 0.0
    %v1763 = vand.u32 %v1374, 4294901760
    %1764 = vmatpush1.msra.mxu0 %v1763
    %1765 = vmatprep.subr.mxu0 0.0
    %v1766 = vand.u32 %v1375, 4294901760
    %1767 = vmatpush1.msra.mxu0 %v1766
    %1768 = vmatprep.subr.mxu0 0.0
    %v1769 = vand.u32 %v1376, 4294901760
    %1770 = vmatpush1.msra.mxu0 %v1769
    %1771 = vmatprep.subr.mxu0 0.0
    %1772 = vmatpush1.msra.mxu0 0.0
    %1773 = vmatprep.subr.mxu0 0.0
    %1774 = vmatpush1.msra.mxu0 0.0
    %1775 = vmatprep.subr.mxu0 0.0
    %1776 = vmatpush1.msra.mxu0 0.0
    %1777 = vmatprep.subr.mxu0 0.0
    %1778 = vmatpush1.msra.mxu0 0.0
    %1779 = vmatprep.subr.mxu0 0.0
    %1780 = vmatpush1.msra.mxu0 0.0
    %1781 = vmatprep.subr.mxu0 0.0
    %1782 = vmatpush1.msra.mxu0 0.0
    %1783 = vmatprep.subr.mxu0 0.0
    %1784 = vmatpush1.msra.mxu0 0.0
    %1785 = vmatprep.subr.mxu0 0.0
    %1786 = vmatpush1.msra.mxu0 0.0
    %1787 = vmatprep.subr.mxu0 0.0
    %1788 = vmatpush1.msra.mxu0 0.0
    %1789 = vmatprep.subr.mxu0 0.0
    %1790 = vmatpush1.msra.mxu0 0.0
    %1791 = vmatprep.subr.mxu0 0.0
    %1792 = vmatpush1.msra.mxu0 0.0
    %1793 = vmatprep.subr.mxu0 0.0
    %1794 = vmatpush1.msra.mxu0 0.0
    %1795 = vmatprep.subr.mxu0 0.0
    %1796 = vmatpush1.msra.mxu0 0.0
    %1797 = vmatprep.subr.mxu0 0.0
    %1798 = vmatpush1.msra.mxu0 0.0
    %1799 = vmatprep.subr.mxu0 0.0
    %1800 = vmatpush1.msra.mxu0 0.0
    %1801 = vmatprep.subr.mxu0 0.0
    %1802 = vmatpush1.msra.mxu0 0.0
    %1803 = vmatprep.mubr.f32.mxu0 0.0
    %v1804 = vand.u32 %v43, 4294901760
    %v1805 = vsub.f32 %v43, %v1804
    %v1806 = vand.u32 %v1805, 4294901760
    %1807 = vmatmul.mubr.f32.gmra.mrb[0].mxu0 %v1806
    %v1808 = vpop.f32.mrb[0].mxu0
    %v1809 = vadd.f32 %v1720, %v1808
    %v1810 = vpop.f32.mrb[0].mxu0
    %1811 = vdwg.mxu0
    %1812 = vmatprep.subr.mxu0 0.0
    %v1813 = vand.u32 %v1361, 4294901760
    %v1814 = vsub.f32 %v1361, %v1813
    %v1815 = vand.u32 %v1814, 4294901760
    %1816 = vmatpush1.msra.mxu0 %v1815
    %1817 = vmatprep.subr.mxu0 0.0
    %v1818 = vand.u32 %v1362, 4294901760
    %v1819 = vsub.f32 %v1362, %v1818
    %v1820 = vand.u32 %v1819, 4294901760
    %1821 = vmatpush1.msra.mxu0 %v1820
    %1822 = vmatprep.subr.mxu0 0.0
    %v1823 = vand.u32 %v1363, 4294901760
    %v1824 = vsub.f32 %v1363, %v1823
    %v1825 = vand.u32 %v1824, 4294901760
    %1826 = vmatpush1.msra.mxu0 %v1825
    %1827 = vmatprep.subr.mxu0 0.0
    %v1828 = vand.u32 %v1364, 4294901760
    %v1829 = vsub.f32 %v1364, %v1828
    %v1830 = vand.u32 %v1829, 4294901760
    %1831 = vmatpush1.msra.mxu0 %v1830
    %1832 = vmatprep.subr.mxu0 0.0
    %v1833 = vand.u32 %v1365, 4294901760
    %v1834 = vsub.f32 %v1365, %v1833
    %v1835 = vand.u32 %v1834, 4294901760
    %1836 = vmatpush1.msra.mxu0 %v1835
    %1837 = vmatprep.subr.mxu0 0.0
    %v1838 = vand.u32 %v1366, 4294901760
    %v1839 = vsub.f32 %v1366, %v1838
    %v1840 = vand.u32 %v1839, 4294901760
    %1841 = vmatpush1.msra.mxu0 %v1840
    %1842 = vmatprep.subr.mxu0 0.0
    %v1843 = vand.u32 %v1367, 4294901760
    %v1844 = vsub.f32 %v1367, %v1843
    %v1845 = vand.u32 %v1844, 4294901760
    %1846 = vmatpush1.msra.mxu0 %v1845
    %1847 = vmatprep.subr.mxu0 0.0
    %v1848 = vand.u32 %v1368, 4294901760
    %v1849 = vsub.f32 %v1368, %v1848
    %v1850 = vand.u32 %v1849, 4294901760
    %1851 = vmatpush1.msra.mxu0 %v1850
    %1852 = vmatprep.subr.mxu0 0.0
    %v1853 = vand.u32 %v1369, 4294901760
    %v1854 = vsub.f32 %v1369, %v1853
    %v1855 = vand.u32 %v1854, 4294901760
    %1856 = vmatpush1.msra.mxu0 %v1855
    %1857 = vmatprep.subr.mxu0 0.0
    %v1858 = vand.u32 %v1370, 4294901760
    %v1859 = vsub.f32 %v1370, %v1858
    %v1860 = vand.u32 %v1859, 4294901760
    %1861 = vmatpush1.msra.mxu0 %v1860
    %1862 = vmatprep.subr.mxu0 0.0
    %v1863 = vand.u32 %v1371, 4294901760
    %v1864 = vsub.f32 %v1371, %v1863
    %v1865 = vand.u32 %v1864, 4294901760
    %1866 = vmatpush1.msra.mxu0 %v1865
    %1867 = vmatprep.subr.mxu0 0.0
    %v1868 = vand.u32 %v1372, 4294901760
    %v1869 = vsub.f32 %v1372, %v1868
    %v1870 = vand.u32 %v1869, 4294901760
    %1871 = vmatpush1.msra.mxu0 %v1870
    %1872 = vmatprep.subr.mxu0 0.0
    %v1873 = vand.u32 %v1373, 4294901760
    %v1874 = vsub.f32 %v1373, %v1873
    %v1875 = vand.u32 %v1874, 4294901760
    %1876 = vmatpush1.msra.mxu0 %v1875
    %1877 = vmatprep.subr.mxu0 0.0
    %v1878 = vand.u32 %v1374, 4294901760
    %v1879 = vsub.f32 %v1374, %v1878
    %v1880 = vand.u32 %v1879, 4294901760
    %1881 = vmatpush1.msra.mxu0 %v1880
    %1882 = vmatprep.subr.mxu0 0.0
    %v1883 = vand.u32 %v1375, 4294901760
    %v1884 = vsub.f32 %v1375, %v1883
    %v1885 = vand.u32 %v1884, 4294901760
    %1886 = vmatpush1.msra.mxu0 %v1885
    %1887 = vmatprep.subr.mxu0 0.0
    %v1888 = vand.u32 %v1376, 4294901760
    %v1889 = vsub.f32 %v1376, %v1888
    %v1890 = vand.u32 %v1889, 4294901760
    %1891 = vmatpush1.msra.mxu0 %v1890
    %1892 = vmatprep.subr.mxu0 0.0
    %1893 = vmatpush1.msra.mxu0 0.0
    %1894 = vmatprep.subr.mxu0 0.0
    %1895 = vmatpush1.msra.mxu0 0.0
    %1896 = vmatprep.subr.mxu0 0.0
    %1897 = vmatpush1.msra.mxu0 0.0
    %1898 = vmatprep.subr.mxu0 0.0
    %1899 = vmatpush1.msra.mxu0 0.0
    %1900 = vmatprep.subr.mxu0 0.0
    %1901 = vmatpush1.msra.mxu0 0.0
    %1902 = vmatprep.subr.mxu0 0.0
    %1903 = vmatpush1.msra.mxu0 0.0
    %1904 = vmatprep.subr.mxu0 0.0
    %1905 = vmatpush1.msra.mxu0 0.0
    %1906 = vmatprep.subr.mxu0 0.0
    %1907 = vmatpush1.msra.mxu0 0.0
    %1908 = vmatprep.subr.mxu0 0.0
    %1909 = vmatpush1.msra.mxu0 0.0
    %1910 = vmatprep.subr.mxu0 0.0
    %1911 = vmatpush1.msra.mxu0 0.0
    %1912 = vmatprep.subr.mxu0 0.0
    %1913 = vmatpush1.msra.mxu0 0.0
    %1914 = vmatprep.subr.mxu0 0.0
    %1915 = vmatpush1.msra.mxu0 0.0
    %1916 = vmatprep.subr.mxu0 0.0
    %1917 = vmatpush1.msra.mxu0 0.0
    %1918 = vmatprep.subr.mxu0 0.0
    %1919 = vmatpush1.msra.mxu0 0.0
    %1920 = vmatprep.subr.mxu0 0.0
    %1921 = vmatpush1.msra.mxu0 0.0
    %1922 = vmatprep.subr.mxu0 0.0
    %1923 = vmatpush1.msra.mxu0 0.0
    %1924 = vmatprep.mubr.f32.mxu0 0.0
    %v1925 = vand.u32 %v43, 4294901760
    %1926 = vmatmul.mubr.f32.gmra.mrb[0].mxu0 %v1925
    %v1927 = vpop.f32.mrb[0].mxu0
    %v1928 = vadd.f32 %v1809, %v1927
    %v1929 = vpop.f32.mrb[0].mxu0
    %1930 = vdwg.mxu0
    %1931 = vmatprep.subr.mxu0 0.0
    %v1932 = vand.u32 %v1361, 4294901760
    %1933 = vmatpush1.msra.mxu0 %v1932
    %1934 = vmatprep.subr.mxu0 0.0
    %v1935 = vand.u32 %v1362, 4294901760
    %1936 = vmatpush1.msra.mxu0 %v1935
    %1937 = vmatprep.subr.mxu0 0.0
    %v1938 = vand.u32 %v1363, 4294901760
    %1939 = vmatpush1.msra.mxu0 %v1938
    %1940 = vmatprep.subr.mxu0 0.0
    %v1941 = vand.u32 %v1364, 4294901760
    %1942 = vmatpush1.msra.mxu0 %v1941
    %1943 = vmatprep.subr.mxu0 0.0
    %v1944 = vand.u32 %v1365, 4294901760
    %1945 = vmatpush1.msra.mxu0 %v1944
    %1946 = vmatprep.subr.mxu0 0.0
    %v1947 = vand.u32 %v1366, 4294901760
    %1948 = vmatpush1.msra.mxu0 %v1947
    %1949 = vmatprep.subr.mxu0 0.0
    %v1950 = vand.u32 %v1367, 4294901760
    %1951 = vmatpush1.msra.mxu0 %v1950
    %1952 = vmatprep.subr.mxu0 0.0
    %v1953 = vand.u32 %v1368, 4294901760
    %1954 = vmatpush1.msra.mxu0 %v1953
    %1955 = vmatprep.subr.mxu0 0.0
    %v1956 = vand.u32 %v1369, 4294901760
    %1957 = vmatpush1.msra.mxu0 %v1956
    %1958 = vmatprep.subr.mxu0 0.0
    %v1959 = vand.u32 %v1370, 4294901760
    %1960 = vmatpush1.msra.mxu0 %v1959
    %1961 = vmatprep.subr.mxu0 0.0
    %v1962 = vand.u32 %v1371, 4294901760
    %1963 = vmatpush1.msra.mxu0 %v1962
    %1964 = vmatprep.subr.mxu0 0.0
    %v1965 = vand.u32 %v1372, 4294901760
    %1966 = vmatpush1.msra.mxu0 %v1965
    %1967 = vmatprep.subr.mxu0 0.0
    %v1968 = vand.u32 %v1373, 4294901760
    %1969 = vmatpush1.msra.mxu0 %v1968
    %1970 = vmatprep.subr.mxu0 0.0
    %v1971 = vand.u32 %v1374, 4294901760
    %1972 = vmatpush1.msra.mxu0 %v1971
    %1973 = vmatprep.subr.mxu0 0.0
    %v1974 = vand.u32 %v1375, 4294901760
    %1975 = vmatpush1.msra.mxu0 %v1974
    %1976 = vmatprep.subr.mxu0 0.0
    %v1977 = vand.u32 %v1376, 4294901760
    %1978 = vmatpush1.msra.mxu0 %v1977
    %1979 = vmatprep.subr.mxu0 0.0
    %1980 = vmatpush1.msra.mxu0 0.0
    %1981 = vmatprep.subr.mxu0 0.0
    %1982 = vmatpush1.msra.mxu0 0.0
    %1983 = vmatprep.subr.mxu0 0.0
    %1984 = vmatpush1.msra.mxu0 0.0
    %1985 = vmatprep.subr.mxu0 0.0
    %1986 = vmatpush1.msra.mxu0 0.0
    %1987 = vmatprep.subr.mxu0 0.0
    %1988 = vmatpush1.msra.mxu0 0.0
    %1989 = vmatprep.subr.mxu0 0.0
    %1990 = vmatpush1.msra.mxu0 0.0
    %1991 = vmatprep.subr.mxu0 0.0
    %1992 = vmatpush1.msra.mxu0 0.0
    %1993 = vmatprep.subr.mxu0 0.0
    %1994 = vmatpush1.msra.mxu0 0.0
    %1995 = vmatprep.subr.mxu0 0.0
    %1996 = vmatpush1.msra.mxu0 0.0
    %1997 = vmatprep.subr.mxu0 0.0
    %1998 = vmatpush1.msra.mxu0 0.0
    %1999 = vmatprep.subr.mxu0 0.0
    %2000 = vmatpush1.msra.mxu0 0.0
    %2001 = vmatprep.subr.mxu0 0.0
    %2002 = vmatpush1.msra.mxu0 0.0
    %2003 = vmatprep.subr.mxu0 0.0
    %2004 = vmatpush1.msra.mxu0 0.0
    %2005 = vmatprep.subr.mxu0 0.0
    %2006 = vmatpush1.msra.mxu0 0.0
    %2007 = vmatprep.subr.mxu0 0.0
    %2008 = vmatpush1.msra.mxu0 0.0
    %2009 = vmatprep.subr.mxu0 0.0
    %2010 = vmatpush1.msra.mxu0 0.0
    %2011 = vmatprep.mubr.f32.mxu0 0.0
    %v2012 = vand.u32 %v43, 4294901760
    %2013 = vmatmul.mubr.f32.gmra.mrb[0].mxu0 %v2012
    %v2014 = vpop.f32.mrb[0].mxu0
    %v2015 = vadd.f32 %v1928, %v2014
    %v2016 = vpop.f32.mrb[0].mxu0
    %2017 = vdwg.mxu0
    %2018 = vst [vmem:[#allocation8 + $0x10] sm:$0xff] %v2015
    %v2019 = vld [vmem:[#allocation6 + $0x18] sm:$0xff]
    %v2020 = vld [vmem:[#allocation6 + $0x38] sm:$0xff]
    %v2021 = vld [vmem:[#allocation6 + $0x58] sm:$0xff]
    %v2022 = vld [vmem:[#allocation6 + $0x78] sm:$0xff]
    %v2023 = vld [vmem:[#allocation6 + $0x98] sm:$0xff]
    %v2024 = vld [vmem:[#allocation6 + $0xb8] sm:$0xff]
    %v2025 = vld [vmem:[#allocation6 + $0xd8] sm:$0xff]
    %v2026 = vld [vmem:[#allocation6 + $0xf8] sm:$0xff]
    %v2027 = vld [vmem:[#allocation6 + $0x118] sm:$0xff]
    %v2028 = vld [vmem:[#allocation6 + $0x138] sm:$0xff]
    %v2029 = vld [vmem:[#allocation6 + $0x158] sm:$0xff]
    %v2030 = vld [vmem:[#allocation6 + $0x178] sm:$0xff]
    %v2031 = vld [vmem:[#allocation6 + $0x198] sm:$0xff]
    %v2032 = vld [vmem:[#allocation6 + $0x1b8] sm:$0xff]
    %v2033 = vld [vmem:[#allocation6 + $0x1d8] sm:$0xff]
    %v2034 = vld [vmem:[#allocation6 + $0x1f8] sm:$0xff]
    %2035 = vmatprep.subr.mxu0 0.0
    %v2036 = vand.u32 %v2019, 4294901760
    %2037 = vmatpush1.msra.mxu0 %v2036
    %2038 = vmatprep.subr.mxu0 0.0
    %v2039 = vand.u32 %v2020, 4294901760
    %2040 = vmatpush1.msra.mxu0 %v2039
    %2041 = vmatprep.subr.mxu0 0.0
    %v2042 = vand.u32 %v2021, 4294901760
    %2043 = vmatpush1.msra.mxu0 %v2042
    %2044 = vmatprep.subr.mxu0 0.0
    %v2045 = vand.u32 %v2022, 4294901760
    %2046 = vmatpush1.msra.mxu0 %v2045
    %2047 = vmatprep.subr.mxu0 0.0
    %v2048 = vand.u32 %v2023, 4294901760
    %2049 = vmatpush1.msra.mxu0 %v2048
    %2050 = vmatprep.subr.mxu0 0.0
    %v2051 = vand.u32 %v2024, 4294901760
    %2052 = vmatpush1.msra.mxu0 %v2051
    %2053 = vmatprep.subr.mxu0 0.0
    %v2054 = vand.u32 %v2025, 4294901760
    %2055 = vmatpush1.msra.mxu0 %v2054
    %2056 = vmatprep.subr.mxu0 0.0
    %v2057 = vand.u32 %v2026, 4294901760
    %2058 = vmatpush1.msra.mxu0 %v2057
    %2059 = vmatprep.subr.mxu0 0.0
    %v2060 = vand.u32 %v2027, 4294901760
    %2061 = vmatpush1.msra.mxu0 %v2060
    %2062 = vmatprep.subr.mxu0 0.0
    %v2063 = vand.u32 %v2028, 4294901760
    %2064 = vmatpush1.msra.mxu0 %v2063
    %2065 = vmatprep.subr.mxu0 0.0
    %v2066 = vand.u32 %v2029, 4294901760
    %2067 = vmatpush1.msra.mxu0 %v2066
    %2068 = vmatprep.subr.mxu0 0.0
    %v2069 = vand.u32 %v2030, 4294901760
    %2070 = vmatpush1.msra.mxu0 %v2069
    %2071 = vmatprep.subr.mxu0 0.0
    %v2072 = vand.u32 %v2031, 4294901760
    %2073 = vmatpush1.msra.mxu0 %v2072
    %2074 = vmatprep.subr.mxu0 0.0
    %v2075 = vand.u32 %v2032, 4294901760
    %2076 = vmatpush1.msra.mxu0 %v2075
    %2077 = vmatprep.subr.mxu0 0.0
    %v2078 = vand.u32 %v2033, 4294901760
    %2079 = vmatpush1.msra.mxu0 %v2078
    %2080 = vmatprep.subr.mxu0 0.0
    %v2081 = vand.u32 %v2034, 4294901760
    %2082 = vmatpush1.msra.mxu0 %v2081
    %2083 = vmatprep.subr.mxu0 0.0
    %2084 = vmatpush1.msra.mxu0 0.0
    %2085 = vmatprep.subr.mxu0 0.0
    %2086 = vmatpush1.msra.mxu0 0.0
    %2087 = vmatprep.subr.mxu0 0.0
    %2088 = vmatpush1.msra.mxu0 0.0
    %2089 = vmatprep.subr.mxu0 0.0
    %2090 = vmatpush1.msra.mxu0 0.0
    %2091 = vmatprep.subr.mxu0 0.0
    %2092 = vmatpush1.msra.mxu0 0.0
    %2093 = vmatprep.subr.mxu0 0.0
    %2094 = vmatpush1.msra.mxu0 0.0
    %2095 = vmatprep.subr.mxu0 0.0
    %2096 = vmatpush1.msra.mxu0 0.0
    %2097 = vmatprep.subr.mxu0 0.0
    %2098 = vmatpush1.msra.mxu0 0.0
    %2099 = vmatprep.subr.mxu0 0.0
    %2100 = vmatpush1.msra.mxu0 0.0
    %2101 = vmatprep.subr.mxu0 0.0
    %2102 = vmatpush1.msra.mxu0 0.0
    %2103 = vmatprep.subr.mxu0 0.0
    %2104 = vmatpush1.msra.mxu0 0.0
    %2105 = vmatprep.subr.mxu0 0.0
    %2106 = vmatpush1.msra.mxu0 0.0
    %2107 = vmatprep.subr.mxu0 0.0
    %2108 = vmatpush1.msra.mxu0 0.0
    %2109 = vmatprep.subr.mxu0 0.0
    %2110 = vmatpush1.msra.mxu0 0.0
    %2111 = vmatprep.subr.mxu0 0.0
    %2112 = vmatpush1.msra.mxu0 0.0
    %2113 = vmatprep.subr.mxu0 0.0
    %2114 = vmatpush1.msra.mxu0 0.0
    %2115 = vmatprep.mubr.f32.mxu0 0.0
    %v2116 = vand.u32 %v43, 4294901760
    %v2117 = vsub.f32 %v43, %v2116
    %v2118 = vand.u32 %v2117, 4294901760
    %v2119 = vsub.f32 %v2117, %v2118
    %v2120 = vand.u32 %v2119, 4294901760
    %2121 = vmatmul.mubr.f32.gmra.mrb[0].mxu0 %v2120
    %v2122 = vpop.f32.mrb[0].mxu0
    %v2123 = vadd.f32 %v60, %v2122
    %v2124 = vpop.f32.mrb[0].mxu0
    %2125 = vdwg.mxu0
    %2126 = vmatprep.subr.mxu0 0.0
    %v2127 = vand.u32 %v2019, 4294901760
    %v2128 = vsub.f32 %v2019, %v2127
    %v2129 = vand.u32 %v2128, 4294901760
    %v2130 = vsub.f32 %v2128, %v2129
    %v2131 = vand.u32 %v2130, 4294901760
    %2132 = vmatpush1.msra.mxu0 %v2131
    %2133 = vmatprep.subr.mxu0 0.0
    %v2134 = vand.u32 %v2020, 4294901760
    %v2135 = vsub.f32 %v2020, %v2134
    %v2136 = vand.u32 %v2135, 4294901760
    %v2137 = vsub.f32 %v2135, %v2136
    %v2138 = vand.u32 %v2137, 4294901760
    %2139 = vmatpush1.msra.mxu0 %v2138
    %2140 = vmatprep.subr.mxu0 0.0
    %v2141 = vand.u32 %v2021, 4294901760
    %v2142 = vsub.f32 %v2021, %v2141
    %v2143 = vand.u32 %v2142, 4294901760
    %v2144 = vsub.f32 %v2142, %v2143
    %v2145 = vand.u32 %v2144, 4294901760
    %2146 = vmatpush1.msra.mxu0 %v2145
    %2147 = vmatprep.subr.mxu0 0.0
    %v2148 = vand.u32 %v2022, 4294901760
    %v2149 = vsub.f32 %v2022, %v2148
    %v2150 = vand.u32 %v2149, 4294901760
    %v2151 = vsub.f32 %v2149, %v2150
    %v2152 = vand.u32 %v2151, 4294901760
    %2153 = vmatpush1.msra.mxu0 %v2152
    %2154 = vmatprep.subr.mxu0 0.0
    %v2155 = vand.u32 %v2023, 4294901760
    %v2156 = vsub.f32 %v2023, %v2155
    %v2157 = vand.u32 %v2156, 4294901760
    %v2158 = vsub.f32 %v2156, %v2157
    %v2159 = vand.u32 %v2158, 4294901760
    %2160 = vmatpush1.msra.mxu0 %v2159
    %2161 = vmatprep.subr.mxu0 0.0
    %v2162 = vand.u32 %v2024, 4294901760
    %v2163 = vsub.f32 %v2024, %v2162
    %v2164 = vand.u32 %v2163, 4294901760
    %v2165 = vsub.f32 %v2163, %v2164
    %v2166 = vand.u32 %v2165, 4294901760
    %2167 = vmatpush1.msra.mxu0 %v2166
    %2168 = vmatprep.subr.mxu0 0.0
    %v2169 = vand.u32 %v2025, 4294901760
    %v2170 = vsub.f32 %v2025, %v2169
    %v2171 = vand.u32 %v2170, 4294901760
    %v2172 = vsub.f32 %v2170, %v2171
    %v2173 = vand.u32 %v2172, 4294901760
    %2174 = vmatpush1.msra.mxu0 %v2173
    %2175 = vmatprep.subr.mxu0 0.0
    %v2176 = vand.u32 %v2026, 4294901760
    %v2177 = vsub.f32 %v2026, %v2176
    %v2178 = vand.u32 %v2177, 4294901760
    %v2179 = vsub.f32 %v2177, %v2178
    %v2180 = vand.u32 %v2179, 4294901760
    %2181 = vmatpush1.msra.mxu0 %v2180
    %2182 = vmatprep.subr.mxu0 0.0
    %v2183 = vand.u32 %v2027, 4294901760
    %v2184 = vsub.f32 %v2027, %v2183
    %v2185 = vand.u32 %v2184, 4294901760
    %v2186 = vsub.f32 %v2184, %v2185
    %v2187 = vand.u32 %v2186, 4294901760
    %2188 = vmatpush1.msra.mxu0 %v2187
    %2189 = vmatprep.subr.mxu0 0.0
    %v2190 = vand.u32 %v2028, 4294901760
    %v2191 = vsub.f32 %v2028, %v2190
    %v2192 = vand.u32 %v2191, 4294901760
    %v2193 = vsub.f32 %v2191, %v2192
    %v2194 = vand.u32 %v2193, 4294901760
    %2195 = vmatpush1.msra.mxu0 %v2194
    %2196 = vmatprep.subr.mxu0 0.0
    %v2197 = vand.u32 %v2029, 4294901760
    %v2198 = vsub.f32 %v2029, %v2197
    %v2199 = vand.u32 %v2198, 4294901760
    %v2200 = vsub.f32 %v2198, %v2199
    %v2201 = vand.u32 %v2200, 4294901760
    %2202 = vmatpush1.msra.mxu0 %v2201
    %2203 = vmatprep.subr.mxu0 0.0
    %v2204 = vand.u32 %v2030, 4294901760
    %v2205 = vsub.f32 %v2030, %v2204
    %v2206 = vand.u32 %v2205, 4294901760
    %v2207 = vsub.f32 %v2205, %v2206
    %v2208 = vand.u32 %v2207, 4294901760
    %2209 = vmatpush1.msra.mxu0 %v2208
    %2210 = vmatprep.subr.mxu0 0.0
    %v2211 = vand.u32 %v2031, 4294901760
    %v2212 = vsub.f32 %v2031, %v2211
    %v2213 = vand.u32 %v2212, 4294901760
    %v2214 = vsub.f32 %v2212, %v2213
    %v2215 = vand.u32 %v2214, 4294901760
    %2216 = vmatpush1.msra.mxu0 %v2215
    %2217 = vmatprep.subr.mxu0 0.0
    %v2218 = vand.u32 %v2032, 4294901760
    %v2219 = vsub.f32 %v2032, %v2218
    %v2220 = vand.u32 %v2219, 4294901760
    %v2221 = vsub.f32 %v2219, %v2220
    %v2222 = vand.u32 %v2221, 4294901760
    %2223 = vmatpush1.msra.mxu0 %v2222
    %2224 = vmatprep.subr.mxu0 0.0
    %v2225 = vand.u32 %v2033, 4294901760
    %v2226 = vsub.f32 %v2033, %v2225
    %v2227 = vand.u32 %v2226, 4294901760
    %v2228 = vsub.f32 %v2226, %v2227
    %v2229 = vand.u32 %v2228, 4294901760
    %2230 = vmatpush1.msra.mxu0 %v2229
    %2231 = vmatprep.subr.mxu0 0.0
    %v2232 = vand.u32 %v2034, 4294901760
    %v2233 = vsub.f32 %v2034, %v2232
    %v2234 = vand.u32 %v2233, 4294901760
    %v2235 = vsub.f32 %v2233, %v2234
    %v2236 = vand.u32 %v2235, 4294901760
    %2237 = vmatpush1.msra.mxu0 %v2236
    %2238 = vmatprep.subr.mxu0 0.0
    %2239 = vmatpush1.msra.mxu0 0.0
    %2240 = vmatprep.subr.mxu0 0.0
    %2241 = vmatpush1.msra.mxu0 0.0
    %2242 = vmatprep.subr.mxu0 0.0
    %2243 = vmatpush1.msra.mxu0 0.0
    %2244 = vmatprep.subr.mxu0 0.0
    %2245 = vmatpush1.msra.mxu0 0.0
    %2246 = vmatprep.subr.mxu0 0.0
    %2247 = vmatpush1.msra.mxu0 0.0
    %2248 = vmatprep.subr.mxu0 0.0
    %2249 = vmatpush1.msra.mxu0 0.0
    %2250 = vmatprep.subr.mxu0 0.0
    %2251 = vmatpush1.msra.mxu0 0.0
    %2252 = vmatprep.subr.mxu0 0.0
    %2253 = vmatpush1.msra.mxu0 0.0
    %2254 = vmatprep.subr.mxu0 0.0
    %2255 = vmatpush1.msra.mxu0 0.0
    %2256 = vmatprep.subr.mxu0 0.0
    %2257 = vmatpush1.msra.mxu0 0.0
    %2258 = vmatprep.subr.mxu0 0.0
    %2259 = vmatpush1.msra.mxu0 0.0
    %2260 = vmatprep.subr.mxu0 0.0
    %2261 = vmatpush1.msra.mxu0 0.0
    %2262 = vmatprep.subr.mxu0 0.0
    %2263 = vmatpush1.msra.mxu0 0.0
    %2264 = vmatprep.subr.mxu0 0.0
    %2265 = vmatpush1.msra.mxu0 0.0
    %2266 = vmatprep.subr.mxu0 0.0
    %2267 = vmatpush1.msra.mxu0 0.0
    %2268 = vmatprep.subr.mxu0 0.0
    %2269 = vmatpush1.msra.mxu0 0.0
    %2270 = vmatprep.mubr.f32.mxu0 0.0
    %v2271 = vand.u32 %v43, 4294901760
    %2272 = vmatmul.mubr.f32.gmra.mrb[0].mxu0 %v2271
    %v2273 = vpop.f32.mrb[0].mxu0
    %v2274 = vadd.f32 %v2123, %v2273
    %v2275 = vpop.f32.mrb[0].mxu0
    %2276 = vdwg.mxu0
    %2277 = vmatprep.subr.mxu0 0.0
    %v2278 = vand.u32 %v2019, 4294901760
    %v2279 = vsub.f32 %v2019, %v2278
    %2280 = vmatpush1.msra.mxu0 %v2279
    %2281 = vmatprep.subr.mxu0 0.0
    %v2282 = vand.u32 %v2020, 4294901760
    %v2283 = vsub.f32 %v2020, %v2282
    %2284 = vmatpush1.msra.mxu0 %v2283
    %2285 = vmatprep.subr.mxu0 0.0
    %v2286 = vand.u32 %v2021, 4294901760
    %v2287 = vsub.f32 %v2021, %v2286
    %2288 = vmatpush1.msra.mxu0 %v2287
    %2289 = vmatprep.subr.mxu0 0.0
    %v2290 = vand.u32 %v2022, 4294901760
    %v2291 = vsub.f32 %v2022, %v2290
    %2292 = vmatpush1.msra.mxu0 %v2291
    %2293 = vmatprep.subr.mxu0 0.0
    %v2294 = vand.u32 %v2023, 4294901760
    %v2295 = vsub.f32 %v2023, %v2294
    %2296 = vmatpush1.msra.mxu0 %v2295
    %2297 = vmatprep.subr.mxu0 0.0
    %v2298 = vand.u32 %v2024, 4294901760
    %v2299 = vsub.f32 %v2024, %v2298
    %2300 = vmatpush1.msra.mxu0 %v2299
    %2301 = vmatprep.subr.mxu0 0.0
    %v2302 = vand.u32 %v2025, 4294901760
    %v2303 = vsub.f32 %v2025, %v2302
    %2304 = vmatpush1.msra.mxu0 %v2303
    %2305 = vmatprep.subr.mxu0 0.0
    %v2306 = vand.u32 %v2026, 4294901760
    %v2307 = vsub.f32 %v2026, %v2306
    %2308 = vmatpush1.msra.mxu0 %v2307
    %2309 = vmatprep.subr.mxu0 0.0
    %v2310 = vand.u32 %v2027, 4294901760
    %v2311 = vsub.f32 %v2027, %v2310
    %2312 = vmatpush1.msra.mxu0 %v2311
    %2313 = vmatprep.subr.mxu0 0.0
    %v2314 = vand.u32 %v2028, 4294901760
    %v2315 = vsub.f32 %v2028, %v2314
    %2316 = vmatpush1.msra.mxu0 %v2315
    %2317 = vmatprep.subr.mxu0 0.0
    %v2318 = vand.u32 %v2029, 4294901760
    %v2319 = vsub.f32 %v2029, %v2318
    %2320 = vmatpush1.msra.mxu0 %v2319
    %2321 = vmatprep.subr.mxu0 0.0
    %v2322 = vand.u32 %v2030, 4294901760
    %v2323 = vsub.f32 %v2030, %v2322
    %2324 = vmatpush1.msra.mxu0 %v2323
    %2325 = vmatprep.subr.mxu0 0.0
    %v2326 = vand.u32 %v2031, 4294901760
    %v2327 = vsub.f32 %v2031, %v2326
    %2328 = vmatpush1.msra.mxu0 %v2327
    %2329 = vmatprep.subr.mxu0 0.0
    %v2330 = vand.u32 %v2032, 4294901760
    %v2331 = vsub.f32 %v2032, %v2330
    %2332 = vmatpush1.msra.mxu0 %v2331
    %2333 = vmatprep.subr.mxu0 0.0
    %v2334 = vand.u32 %v2033, 4294901760
    %v2335 = vsub.f32 %v2033, %v2334
    %2336 = vmatpush1.msra.mxu0 %v2335
    %2337 = vmatprep.subr.mxu0 0.0
    %v2338 = vand.u32 %v2034, 4294901760
    %v2339 = vsub.f32 %v2034, %v2338
    %2340 = vmatpush1.msra.mxu0 %v2339
    %2341 = vmatprep.subr.mxu0 0.0
    %2342 = vmatpush1.msra.mxu0 0.0
    %2343 = vmatprep.subr.mxu0 0.0
    %2344 = vmatpush1.msra.mxu0 0.0
    %2345 = vmatprep.subr.mxu0 0.0
    %2346 = vmatpush1.msra.mxu0 0.0
    %2347 = vmatprep.subr.mxu0 0.0
    %2348 = vmatpush1.msra.mxu0 0.0
    %2349 = vmatprep.subr.mxu0 0.0
    %2350 = vmatpush1.msra.mxu0 0.0
    %2351 = vmatprep.subr.mxu0 0.0
    %2352 = vmatpush1.msra.mxu0 0.0
    %2353 = vmatprep.subr.mxu0 0.0
    %2354 = vmatpush1.msra.mxu0 0.0
    %2355 = vmatprep.subr.mxu0 0.0
    %2356 = vmatpush1.msra.mxu0 0.0
    %2357 = vmatprep.subr.mxu0 0.0
    %2358 = vmatpush1.msra.mxu0 0.0
    %2359 = vmatprep.subr.mxu0 0.0
    %2360 = vmatpush1.msra.mxu0 0.0
    %2361 = vmatprep.subr.mxu0 0.0
    %2362 = vmatpush1.msra.mxu0 0.0
    %2363 = vmatprep.subr.mxu0 0.0
    %2364 = vmatpush1.msra.mxu0 0.0
    %2365 = vmatprep.subr.mxu0 0.0
    %2366 = vmatpush1.msra.mxu0 0.0
    %2367 = vmatprep.subr.mxu0 0.0
    %2368 = vmatpush1.msra.mxu0 0.0
    %2369 = vmatprep.subr.mxu0 0.0
    %2370 = vmatpush1.msra.mxu0 0.0
    %2371 = vmatprep.subr.mxu0 0.0
    %2372 = vmatpush1.msra.mxu0 0.0
    %2373 = vmatprep.mubr.f32.mxu0 0.0
    %v2374 = vand.u32 %v43, 4294901760
    %v2375 = vsub.f32 %v43, %v2374
    %2376 = vmatmul.mubr.f32.gmra.mrb[0].mxu0 %v2375
    %v2377 = vpop.f32.mrb[0].mxu0
    %v2378 = vadd.f32 %v2274, %v2377
    %v2379 = vpop.f32.mrb[0].mxu0
    %2380 = vdwg.mxu0
    %2381 = vmatprep.subr.mxu0 0.0
    %v2382 = vand.u32 %v2019, 4294901760
    %2383 = vmatpush1.msra.mxu0 %v2382
    %2384 = vmatprep.subr.mxu0 0.0
    %v2385 = vand.u32 %v2020, 4294901760
    %2386 = vmatpush1.msra.mxu0 %v2385
    %2387 = vmatprep.subr.mxu0 0.0
    %v2388 = vand.u32 %v2021, 4294901760
    %2389 = vmatpush1.msra.mxu0 %v2388
    %2390 = vmatprep.subr.mxu0 0.0
    %v2391 = vand.u32 %v2022, 4294901760
    %2392 = vmatpush1.msra.mxu0 %v2391
    %2393 = vmatprep.subr.mxu0 0.0
    %v2394 = vand.u32 %v2023, 4294901760
    %2395 = vmatpush1.msra.mxu0 %v2394
    %2396 = vmatprep.subr.mxu0 0.0
    %v2397 = vand.u32 %v2024, 4294901760
    %2398 = vmatpush1.msra.mxu0 %v2397
    %2399 = vmatprep.subr.mxu0 0.0
    %v2400 = vand.u32 %v2025, 4294901760
    %2401 = vmatpush1.msra.mxu0 %v2400
    %2402 = vmatprep.subr.mxu0 0.0
    %v2403 = vand.u32 %v2026, 4294901760
    %2404 = vmatpush1.msra.mxu0 %v2403
    %2405 = vmatprep.subr.mxu0 0.0
    %v2406 = vand.u32 %v2027, 4294901760
    %2407 = vmatpush1.msra.mxu0 %v2406
    %2408 = vmatprep.subr.mxu0 0.0
    %v2409 = vand.u32 %v2028, 4294901760
    %2410 = vmatpush1.msra.mxu0 %v2409
    %2411 = vmatprep.subr.mxu0 0.0
    %v2412 = vand.u32 %v2029, 4294901760
    %2413 = vmatpush1.msra.mxu0 %v2412
    %2414 = vmatprep.subr.mxu0 0.0
    %v2415 = vand.u32 %v2030, 4294901760
    %2416 = vmatpush1.msra.mxu0 %v2415
    %2417 = vmatprep.subr.mxu0 0.0
    %v2418 = vand.u32 %v2031, 4294901760
    %2419 = vmatpush1.msra.mxu0 %v2418
    %2420 = vmatprep.subr.mxu0 0.0
    %v2421 = vand.u32 %v2032, 4294901760
    %2422 = vmatpush1.msra.mxu0 %v2421
    %2423 = vmatprep.subr.mxu0 0.0
    %v2424 = vand.u32 %v2033, 4294901760
    %2425 = vmatpush1.msra.mxu0 %v2424
    %2426 = vmatprep.subr.mxu0 0.0
    %v2427 = vand.u32 %v2034, 4294901760
    %2428 = vmatpush1.msra.mxu0 %v2427
    %2429 = vmatprep.subr.mxu0 0.0
    %2430 = vmatpush1.msra.mxu0 0.0
    %2431 = vmatprep.subr.mxu0 0.0
    %2432 = vmatpush1.msra.mxu0 0.0
    %2433 = vmatprep.subr.mxu0 0.0
    %2434 = vmatpush1.msra.mxu0 0.0
    %2435 = vmatprep.subr.mxu0 0.0
    %2436 = vmatpush1.msra.mxu0 0.0
    %2437 = vmatprep.subr.mxu0 0.0
    %2438 = vmatpush1.msra.mxu0 0.0
    %2439 = vmatprep.subr.mxu0 0.0
    %2440 = vmatpush1.msra.mxu0 0.0
    %2441 = vmatprep.subr.mxu0 0.0
    %2442 = vmatpush1.msra.mxu0 0.0
    %2443 = vmatprep.subr.mxu0 0.0
    %2444 = vmatpush1.msra.mxu0 0.0
    %2445 = vmatprep.subr.mxu0 0.0
    %2446 = vmatpush1.msra.mxu0 0.0
    %2447 = vmatprep.subr.mxu0 0.0
    %2448 = vmatpush1.msra.mxu0 0.0
    %2449 = vmatprep.subr.mxu0 0.0
    %2450 = vmatpush1.msra.mxu0 0.0
    %2451 = vmatprep.subr.mxu0 0.0
    %2452 = vmatpush1.msra.mxu0 0.0
    %2453 = vmatprep.subr.mxu0 0.0
    %2454 = vmatpush1.msra.mxu0 0.0
    %2455 = vmatprep.subr.mxu0 0.0
    %2456 = vmatpush1.msra.mxu0 0.0
    %2457 = vmatprep.subr.mxu0 0.0
    %2458 = vmatpush1.msra.mxu0 0.0
    %2459 = vmatprep.subr.mxu0 0.0
    %2460 = vmatpush1.msra.mxu0 0.0
    %2461 = vmatprep.mubr.f32.mxu0 0.0
    %v2462 = vand.u32 %v43, 4294901760
    %v2463 = vsub.f32 %v43, %v2462
    %v2464 = vand.u32 %v2463, 4294901760
    %2465 = vmatmul.mubr.f32.gmra.mrb[0].mxu0 %v2464
    %v2466 = vpop.f32.mrb[0].mxu0
    %v2467 = vadd.f32 %v2378, %v2466
    %v2468 = vpop.f32.mrb[0].mxu0
    %2469 = vdwg.mxu0
    %2470 = vmatprep.subr.mxu0 0.0
    %v2471 = vand.u32 %v2019, 4294901760
    %v2472 = vsub.f32 %v2019, %v2471
    %v2473 = vand.u32 %v2472, 4294901760
    %2474 = vmatpush1.msra.mxu0 %v2473
    %2475 = vmatprep.subr.mxu0 0.0
    %v2476 = vand.u32 %v2020, 4294901760
    %v2477 = vsub.f32 %v2020, %v2476
    %v2478 = vand.u32 %v2477, 4294901760
    %2479 = vmatpush1.msra.mxu0 %v2478
    %2480 = vmatprep.subr.mxu0 0.0
    %v2481 = vand.u32 %v2021, 4294901760
    %v2482 = vsub.f32 %v2021, %v2481
    %v2483 = vand.u32 %v2482, 4294901760
    %2484 = vmatpush1.msra.mxu0 %v2483
    %2485 = vmatprep.subr.mxu0 0.0
    %v2486 = vand.u32 %v2022, 4294901760
    %v2487 = vsub.f32 %v2022, %v2486
    %v2488 = vand.u32 %v2487, 4294901760
    %2489 = vmatpush1.msra.mxu0 %v2488
    %2490 = vmatprep.subr.mxu0 0.0
    %v2491 = vand.u32 %v2023, 4294901760
    %v2492 = vsub.f32 %v2023, %v2491
    %v2493 = vand.u32 %v2492, 4294901760
    %2494 = vmatpush1.msra.mxu0 %v2493
    %2495 = vmatprep.subr.mxu0 0.0
    %v2496 = vand.u32 %v2024, 4294901760
    %v2497 = vsub.f32 %v2024, %v2496
    %v2498 = vand.u32 %v2497, 4294901760
    %2499 = vmatpush1.msra.mxu0 %v2498
    %2500 = vmatprep.subr.mxu0 0.0
    %v2501 = vand.u32 %v2025, 4294901760
    %v2502 = vsub.f32 %v2025, %v2501
    %v2503 = vand.u32 %v2502, 4294901760
    %2504 = vmatpush1.msra.mxu0 %v2503
    %2505 = vmatprep.subr.mxu0 0.0
    %v2506 = vand.u32 %v2026, 4294901760
    %v2507 = vsub.f32 %v2026, %v2506
    %v2508 = vand.u32 %v2507, 4294901760
    %2509 = vmatpush1.msra.mxu0 %v2508
    %2510 = vmatprep.subr.mxu0 0.0
    %v2511 = vand.u32 %v2027, 4294901760
    %v2512 = vsub.f32 %v2027, %v2511
    %v2513 = vand.u32 %v2512, 4294901760
    %2514 = vmatpush1.msra.mxu0 %v2513
    %2515 = vmatprep.subr.mxu0 0.0
    %v2516 = vand.u32 %v2028, 4294901760
    %v2517 = vsub.f32 %v2028, %v2516
    %v2518 = vand.u32 %v2517, 4294901760
    %2519 = vmatpush1.msra.mxu0 %v2518
    %2520 = vmatprep.subr.mxu0 0.0
    %v2521 = vand.u32 %v2029, 4294901760
    %v2522 = vsub.f32 %v2029, %v2521
    %v2523 = vand.u32 %v2522, 4294901760
    %2524 = vmatpush1.msra.mxu0 %v2523
    %2525 = vmatprep.subr.mxu0 0.0
    %v2526 = vand.u32 %v2030, 4294901760
    %v2527 = vsub.f32 %v2030, %v2526
    %v2528 = vand.u32 %v2527, 4294901760
    %2529 = vmatpush1.msra.mxu0 %v2528
    %2530 = vmatprep.subr.mxu0 0.0
    %v2531 = vand.u32 %v2031, 4294901760
    %v2532 = vsub.f32 %v2031, %v2531
    %v2533 = vand.u32 %v2532, 4294901760
    %2534 = vmatpush1.msra.mxu0 %v2533
    %2535 = vmatprep.subr.mxu0 0.0
    %v2536 = vand.u32 %v2032, 4294901760
    %v2537 = vsub.f32 %v2032, %v2536
    %v2538 = vand.u32 %v2537, 4294901760
    %2539 = vmatpush1.msra.mxu0 %v2538
    %2540 = vmatprep.subr.mxu0 0.0
    %v2541 = vand.u32 %v2033, 4294901760
    %v2542 = vsub.f32 %v2033, %v2541
    %v2543 = vand.u32 %v2542, 4294901760
    %2544 = vmatpush1.msra.mxu0 %v2543
    %2545 = vmatprep.subr.mxu0 0.0
    %v2546 = vand.u32 %v2034, 4294901760
    %v2547 = vsub.f32 %v2034, %v2546
    %v2548 = vand.u32 %v2547, 4294901760
    %2549 = vmatpush1.msra.mxu0 %v2548
    %2550 = vmatprep.subr.mxu0 0.0
    %2551 = vmatpush1.msra.mxu0 0.0
    %2552 = vmatprep.subr.mxu0 0.0
    %2553 = vmatpush1.msra.mxu0 0.0
    %2554 = vmatprep.subr.mxu0 0.0
    %2555 = vmatpush1.msra.mxu0 0.0
    %2556 = vmatprep.subr.mxu0 0.0
    %2557 = vmatpush1.msra.mxu0 0.0
    %2558 = vmatprep.subr.mxu0 0.0
    %2559 = vmatpush1.msra.mxu0 0.0
    %2560 = vmatprep.subr.mxu0 0.0
    %2561 = vmatpush1.msra.mxu0 0.0
    %2562 = vmatprep.subr.mxu0 0.0
    %2563 = vmatpush1.msra.mxu0 0.0
    %2564 = vmatprep.subr.mxu0 0.0
    %2565 = vmatpush1.msra.mxu0 0.0
    %2566 = vmatprep.subr.mxu0 0.0
    %2567 = vmatpush1.msra.mxu0 0.0
    %2568 = vmatprep.subr.mxu0 0.0
    %2569 = vmatpush1.msra.mxu0 0.0
    %2570 = vmatprep.subr.mxu0 0.0
    %2571 = vmatpush1.msra.mxu0 0.0
    %2572 = vmatprep.subr.mxu0 0.0
    %2573 = vmatpush1.msra.mxu0 0.0
    %2574 = vmatprep.subr.mxu0 0.0
    %2575 = vmatpush1.msra.mxu0 0.0
    %2576 = vmatprep.subr.mxu0 0.0
    %2577 = vmatpush1.msra.mxu0 0.0
    %2578 = vmatprep.subr.mxu0 0.0
    %2579 = vmatpush1.msra.mxu0 0.0
    %2580 = vmatprep.subr.mxu0 0.0
    %2581 = vmatpush1.msra.mxu0 0.0
    %2582 = vmatprep.mubr.f32.mxu0 0.0
    %v2583 = vand.u32 %v43, 4294901760
    %2584 = vmatmul.mubr.f32.gmra.mrb[0].mxu0 %v2583
    %v2585 = vpop.f32.mrb[0].mxu0
    %v2586 = vadd.f32 %v2467, %v2585
    %v2587 = vpop.f32.mrb[0].mxu0
    %2588 = vdwg.mxu0
    %2589 = vmatprep.subr.mxu0 0.0
    %v2590 = vand.u32 %v2019, 4294901760
    %2591 = vmatpush1.msra.mxu0 %v2590
    %2592 = vmatprep.subr.mxu0 0.0
    %v2593 = vand.u32 %v2020, 4294901760
    %2594 = vmatpush1.msra.mxu0 %v2593
    %2595 = vmatprep.subr.mxu0 0.0
    %v2596 = vand.u32 %v2021, 4294901760
    %2597 = vmatpush1.msra.mxu0 %v2596
    %2598 = vmatprep.subr.mxu0 0.0
    %v2599 = vand.u32 %v2022, 4294901760
    %2600 = vmatpush1.msra.mxu0 %v2599
    %2601 = vmatprep.subr.mxu0 0.0
    %v2602 = vand.u32 %v2023, 4294901760
    %2603 = vmatpush1.msra.mxu0 %v2602
    %2604 = vmatprep.subr.mxu0 0.0
    %v2605 = vand.u32 %v2024, 4294901760
    %2606 = vmatpush1.msra.mxu0 %v2605
    %2607 = vmatprep.subr.mxu0 0.0
    %v2608 = vand.u32 %v2025, 4294901760
    %2609 = vmatpush1.msra.mxu0 %v2608
    %2610 = vmatprep.subr.mxu0 0.0
    %v2611 = vand.u32 %v2026, 4294901760
    %2612 = vmatpush1.msra.mxu0 %v2611
    %2613 = vmatprep.subr.mxu0 0.0
    %v2614 = vand.u32 %v2027, 4294901760
    %2615 = vmatpush1.msra.mxu0 %v2614
    %2616 = vmatprep.subr.mxu0 0.0
    %v2617 = vand.u32 %v2028, 4294901760
    %2618 = vmatpush1.msra.mxu0 %v2617
    %2619 = vmatprep.subr.mxu0 0.0
    %v2620 = vand.u32 %v2029, 4294901760
    %2621 = vmatpush1.msra.mxu0 %v2620
    %2622 = vmatprep.subr.mxu0 0.0
    %v2623 = vand.u32 %v2030, 4294901760
    %2624 = vmatpush1.msra.mxu0 %v2623
    %2625 = vmatprep.subr.mxu0 0.0
    %v2626 = vand.u32 %v2031, 4294901760
    %2627 = vmatpush1.msra.mxu0 %v2626
    %2628 = vmatprep.subr.mxu0 0.0
    %v2629 = vand.u32 %v2032, 4294901760
    %2630 = vmatpush1.msra.mxu0 %v2629
    %2631 = vmatprep.subr.mxu0 0.0
    %v2632 = vand.u32 %v2033, 4294901760
    %2633 = vmatpush1.msra.mxu0 %v2632
    %2634 = vmatprep.subr.mxu0 0.0
    %v2635 = vand.u32 %v2034, 4294901760
    %2636 = vmatpush1.msra.mxu0 %v2635
    %2637 = vmatprep.subr.mxu0 0.0
    %2638 = vmatpush1.msra.mxu0 0.0
    %2639 = vmatprep.subr.mxu0 0.0
    %2640 = vmatpush1.msra.mxu0 0.0
    %2641 = vmatprep.subr.mxu0 0.0
    %2642 = vmatpush1.msra.mxu0 0.0
    %2643 = vmatprep.subr.mxu0 0.0
    %2644 = vmatpush1.msra.mxu0 0.0
    %2645 = vmatprep.subr.mxu0 0.0
    %2646 = vmatpush1.msra.mxu0 0.0
    %2647 = vmatprep.subr.mxu0 0.0
    %2648 = vmatpush1.msra.mxu0 0.0
    %2649 = vmatprep.subr.mxu0 0.0
    %2650 = vmatpush1.msra.mxu0 0.0
    %2651 = vmatprep.subr.mxu0 0.0
    %2652 = vmatpush1.msra.mxu0 0.0
    %2653 = vmatprep.subr.mxu0 0.0
    %2654 = vmatpush1.msra.mxu0 0.0
    %2655 = vmatprep.subr.mxu0 0.0
    %2656 = vmatpush1.msra.mxu0 0.0
    %2657 = vmatprep.subr.mxu0 0.0
    %2658 = vmatpush1.msra.mxu0 0.0
    %2659 = vmatprep.subr.mxu0 0.0
    %2660 = vmatpush1.msra.mxu0 0.0
    %2661 = vmatprep.subr.mxu0 0.0
    %2662 = vmatpush1.msra.mxu0 0.0
    %2663 = vmatprep.subr.mxu0 0.0
    %2664 = vmatpush1.msra.mxu0 0.0
    %2665 = vmatprep.subr.mxu0 0.0
    %2666 = vmatpush1.msra.mxu0 0.0
    %2667 = vmatprep.subr.mxu0 0.0
    %2668 = vmatpush1.msra.mxu0 0.0
    %2669 = vmatprep.mubr.f32.mxu0 0.0
    %v2670 = vand.u32 %v43, 4294901760
    %2671 = vmatmul.mubr.f32.gmra.mrb[0].mxu0 %v2670
    %v2672 = vpop.f32.mrb[0].mxu0
    %v2673 = vadd.f32 %v2586, %v2672
    %v2674 = vpop.f32.mrb[0].mxu0
    %2675 = vdwg.mxu0
    %2676 = vst [vmem:[#allocation8 + $0x18] sm:$0xff] %v2673
    // Predicated region
    $region22: #{tpu_custom_call.1} parent=1 // pred_check
      _
    $region23: #{tpu_custom_call.1} parent=1 // pred_check_branch
      %2678 = sbr.rel (0) target = $region25
    $region24: #{tpu_custom_call.1} parent=1 // pred_region
      %s2680 = ssub.s32 512, 512
      %2681 = vsyncadd [#allocation5], %s2680
      %s2683 = sshll.u32 [#allocation8], 4
      %s2684 = int_to_ptr.vmem [resolvable:$true] %s2683
      %2686 = dma.vmem_to_hbm [thread:$0]  %s2684, 512, %s3, [#allocation5]
    $region25: #{tpu_custom_call.1} parent=1 // pred_fallthru
      _
    // Predicated region
    $region26: #{tpu_custom_call.1} parent=1 // pred_check
      _
    $region27: #{tpu_custom_call.1} parent=1 // pred_check_branch
      %2688 = sbr.rel (0) target = $region29
    $region28: #{tpu_custom_call.1} parent=1 // pred_region
      %2689 = dma.done [#allocation5], 512
    $region29: #{tpu_custom_call.1} parent=1 // pred_fallthru
      _
    %2690 = vsyncpa [#allocation4], 1
    %2691 = vsyncpa [#allocation7], 1
    %2692 = vsyncpa [#allocation5], 1

</llo_original>
